<compile_context>
chip_gen: v6e
topology: v6e:2x2x1
jax: 0.10.0
libtpu: 0.0.40
codegen_flags: <defaults>
</compile_context>

<pallas_src>
import functools

import jax
import jax.numpy as jnp
from jax.experimental import pallas as pl
from jax.experimental.pallas import tpu as pltpu

KH = KW = 3
PAD = 1
BN_EPS = 1e-5
LANE = 128
SUBLANE = 8
TARGET_ROWS = 512            # target matmul-M rows per pass-1/pass-2 grid step


def _round_up(x, m):
    return ((x + m - 1) // m) * m


def _cdiv(a, b):
    return -(-a // b)


@functools.lru_cache(maxsize=1)
def _vmem_limit_bytes():
    # Raise the scoped-VMEM limit above the 16/32 MiB defaults but stay well
    # under physical capacity (64 MiB on v7x, 128 MiB on v5e/v6e).
    try:
        cap = int(pltpu.get_tpu_info().vmem_capacity_bytes)
    except Exception:
        cap = 64 * 1024 * 1024
    return max(32 * 1024 * 1024, (cap * 3) // 4)


# ---------------------------------------------------------------------------
# Kernel 1: 2x2 max-pool.  The wrapper only does a free row-major reshape
# (N,H,W,C) -> (N*Hp, 2, Wp, 2, C); the kernel reduces the two window axes.
# ---------------------------------------------------------------------------
def _maxpool_kernel(x_ref, o_ref):
    x = x_ref[...]                                  # (th, 2, Wp, 2, C)
    o_ref[...] = jnp.max(jnp.max(x, axis=3), axis=1)  # (th, Wp, C)


def maxpool2x2(x_nhwc, *, block_bytes=4 * 1024 * 1024):
    N, H, W, C = x_nhwc.shape
    Hp, Wp = H // 2, W // 2
    x = x_nhwc[:, : 2 * Hp, : 2 * Wp, :]            # MaxPool2d(2) floor behavior
    R = N * Hp
    xr = x.reshape(R, 2, Wp, 2, C)                  # free reshape, no transpose
    itemsize = jnp.dtype(x_nhwc.dtype).itemsize
    row_bytes = 4 * Wp * C * itemsize
    cap = min(R, 1024, max(1, block_bytes // max(1, row_bytes)))
    th = 1
    for d in range(1, cap + 1):                     # largest divisor of R <= cap
        if R % d == 0:
            th = d
    out = pl.pallas_call(
        _maxpool_kernel,
        out_shape=jax.ShapeDtypeStruct((R, Wp, C), x_nhwc.dtype),
        grid=(R // th,),
        in_specs=[pl.BlockSpec((th, 2, Wp, 2, C), lambda i: (i, 0, 0, 0, 0))],
        out_specs=pl.BlockSpec((th, Wp, C), lambda i: (i, 0, 0)),
        compiler_params=pltpu.CompilerParams(
            dimension_semantics=("parallel",),
            vmem_limit_bytes=_vmem_limit_bytes()),
    )(xr)
    return out.reshape(N, Hp, Wp, C)


# ---------------------------------------------------------------------------
# Kernel 2 (pass 1): per row-band 3x3 conv as 9 static-slice MXU dots
# (accumulated in f32) + per-band partial BN statistics.
# ---------------------------------------------------------------------------
def _conv_stats_kernel(xb_ref, w_ref, y_ref, s_ref, *, tr, w_out, cin):
    # xb_ref: (1, tr+2, W+2, cin)   halo'd input band (matmul dtype)
    # w_ref : (9, cin, tn)          per-tap weight matrices (matmul dtype)
    # y_ref : (1, tr*W, tn)         conv output for this band (bf16 or f32)
    # s_ref : (1, 2, tn)            partial [sum, sumsq] over this band (f32)
    acc = None
    for kh in range(KH):
        for kw in range(KW):
            a = xb_ref[0, kh:kh + tr, kw:kw + w_out, :].reshape(tr * w_out, cin)
            d = jnp.dot(a, w_ref[kh * KW + kw],
                        preferred_element_type=jnp.float32)
            acc = d if acc is None else acc + d
    y_ref[0] = acc.astype(y_ref.dtype)
    s_ref[0, 0:1, :] = jnp.sum(acc, axis=0, keepdims=True)
    s_ref[0, 1:2, :] = jnp.sum(acc * acc, axis=0, keepdims=True)


# ---------------------------------------------------------------------------
# Kernel 3 (pass 2): streaming normalize + ReLU with precomputed scale/shift.
# ---------------------------------------------------------------------------
def _bn_relu_kernel(y_ref, sc_ref, sh_ref, o_ref):
    y = y_ref[...].astype(jnp.float32)
    o_ref[...] = jnp.maximum(y * sc_ref[...] + sh_ref[...], 0.0).astype(o_ref.dtype)


def conv_bn_relu(x_nhwc, w_oihw, gamma, beta, *, matmul_dtype=jnp.bfloat16):
    """One ConvBatchNorm block: Conv3x3(s1,p1) -> BN(train) -> ReLU.  NHWC."""
    N, H, W, Cin = x_nhwc.shape
    Cout = w_oihw.shape[0]
    M = N * H * W                                   # true element count for BN

    cin_p = _round_up(Cin, SUBLANE)
    Cp = _round_up(Cout, LANE)
    if Cp % 512 == 0 and Cp > 512:
        tn = 512
    elif Cp % 256 == 0 and Cp > 256:
        tn = 256
    else:
        tn = min(Cp, 128) if Cp <= 128 else (256 if Cp % 256 == 0 else 128)
    n_ctiles = Cp // tn

    # row-band size: ~TARGET_ROWS matmul rows per grid step, multiple of 8
    tr = min(_round_up(H, SUBLANE),
             _round_up(max(1, _cdiv(TARGET_ROWS, W)), SUBLANE))
    n_bands = _cdiv(H, tr)
    Hb = n_bands * tr
    nb_total = N * n_bands
    trw = tr * W

    bf16 = jnp.dtype(matmul_dtype) == jnp.dtype(jnp.bfloat16)
    y_dtype = jnp.bfloat16 if bf16 else jnp.float32

    # --- wrapper-side layout only: spatial pad + halo'd row bands ----------
    # (~(tr+2)/tr of the activation, vs 9x for an HBM-materialized im2col)
    xp = jnp.pad(x_nhwc, ((0, 0), (PAD, Hb - H + PAD), (PAD, PAD),
                          (0, cin_p - Cin))).astype(matmul_dtype)
    bands = jnp.stack([xp[:, j * tr: j * tr + tr + 2] for j in range(n_bands)],
                      axis=1).reshape(nb_total, tr + 2, W + 2, cin_p)

    # per-tap weight matrices: OIHW -> (KH*KW, Cin, Cout), padded, matmul dtype
    wt = jnp.transpose(w_oihw, (2, 3, 1, 0)).reshape(KH * KW, Cin, Cout)
    wt = jnp.pad(wt, ((0, 0), (0, cin_p - Cin), (0, Cp - Cout))).astype(matmul_dtype)

    vmem = _vmem_limit_bytes()

    # --- pass 1: 9-tap MXU accumulation + per-band partial stats -----------
    kern1 = functools.partial(_conv_stats_kernel, tr=tr, w_out=W, cin=cin_p)
    conv_out, stats = pl.pallas_call(
        kern1,
        out_shape=(jax.ShapeDtypeStruct((nb_total, trw, Cp), y_dtype),
                   jax.ShapeDtypeStruct((nb_total, 2, Cp), jnp.float32)),
        grid=(nb_total, n_ctiles),
        in_specs=[pl.BlockSpec((1, tr + 2, W + 2, cin_p),
                               lambda b, j: (b, 0, 0, 0)),
                  pl.BlockSpec((KH * KW, cin_p, tn), lambda b, j: (0, 0, j))],
        out_specs=(pl.BlockSpec((1, trw, tn), lambda b, j: (b, 0, j)),
                   pl.BlockSpec((1, 2, tn), lambda b, j: (b, 0, j))),
        compiler_params=pltpu.CompilerParams(
            dimension_semantics=("parallel", "parallel"),
            vmem_limit_bytes=vmem),
    )(bands, wt)

    # --- tiny one-shot BN reduction (n_bands x 2 x Cp elements) in XLA ------
    # Zero-padded rows/channels contribute 0 to both sums, so dividing by the
    # true M gives exact training-mode statistics.
    totals = jnp.sum(stats, axis=0)                       # (2, Cp)
    mean = totals[0] / M
    var = jnp.maximum(totals[1] / M - mean * mean, 0.0)   # biased variance
    g = jnp.pad(gamma.astype(jnp.float32), (0, Cp - Cout))
    b = jnp.pad(beta.astype(jnp.float32), (0, Cp - Cout))
    scale_v = g * jax.lax.rsqrt(var + BN_EPS)
    shift_v = b - mean * scale_v
    scale = scale_v.reshape(1, 1, Cp)
    shift = shift_v.reshape(1, 1, Cp)

    # --- pass 2: streaming normalize + ReLU (memory-bound, big tiles) ------
    out = pl.pallas_call(
        _bn_relu_kernel,
        out_shape=jax.ShapeDtypeStruct((nb_total, trw, Cp), x_nhwc.dtype),
        grid=(nb_total,),
        in_specs=[pl.BlockSpec((1, trw, Cp), lambda i: (i, 0, 0)),
                  pl.BlockSpec((1, 1, Cp), lambda i: (0, 0, 0)),
                  pl.BlockSpec((1, 1, Cp), lambda i: (0, 0, 0))],
        out_specs=pl.BlockSpec((1, trw, Cp), lambda i: (i, 0, 0)),
        compiler_params=pltpu.CompilerParams(
            dimension_semantics=("parallel",),
            vmem_limit_bytes=vmem),
    )(conv_out, scale, shift)

    # strip channel / row padding (layout only)
    out = out.reshape(N, n_bands, tr, W, Cp)[:, :, :, :, :Cout]
    out = out.reshape(N, Hb, W, Cout)[:, :H]
    return out


def down_block_forward(x_nchw, conv_params, *, matmul_dtype=jnp.bfloat16):
    """DownBlock.forward: maxpool(2) then nb_Conv x ConvBatchNorm.  NCHW in/out.

    conv_params: list of (w_oihw, bias, gamma, beta).  The conv bias is
    accepted for API parity but unused: training-mode BN subtracts the batch
    mean, so the bias cancels exactly.
    """
    x = jnp.transpose(x_nchw, (0, 2, 3, 1))         # NCHW -> NHWC
    x = maxpool2x2(x)
    for (w, _bias, gamma, beta) in conv_params:     # bias is a no-op under BN(train)
        x = conv_bn_relu(x, w, gamma, beta, matmul_dtype=matmul_dtype)
    return jnp.transpose(x, (0, 3, 1, 2))           # NHWC -> NCHW


# ---------------------------------------------------------------------------
# Pure-JAX reference mirroring the PyTorch module (for validation).
# ---------------------------------------------------------------------------
def _reference_forward(x_nchw, conv_params):
    N, C, H, W = x_nchw.shape
    Hp, Wp = H // 2, W // 2
    xp = x_nchw[:, :, : 2 * Hp, : 2 * Wp].reshape(N, C, Hp, 2, Wp, 2)
    out = jnp.max(jnp.max(xp, axis=5), axis=3)      # MaxPool2d(2)
    for (w, b, gamma, beta) in conv_params:
        y = jax.lax.conv_general_dilated(
            out, w, window_strides=(1, 1), padding=((PAD, PAD), (PAD, PAD)),
            dimension_numbers=("NCHW", "OIHW", "NCHW"),
        ) + b.reshape(1, -1, 1, 1)
        mean = jnp.mean(y, axis=(0, 2, 3), keepdims=True)
        var = jnp.mean((y - mean) ** 2, axis=(0, 2, 3), keepdims=True)
        y = (y - mean) * jax.lax.rsqrt(var + BN_EPS)
        y = y * gamma.reshape(1, -1, 1, 1) + beta.reshape(1, -1, 1, 1)
        out = jnp.maximum(y, 0.0)                   # get_activation -> nn.ReLU()
    return out


if __name__ == "__main__":
    key = jax.random.PRNGKey(0)
    ks = jax.random.split(key, 9)

    N, Cin, Cout, H, W, nb_conv = 2, 4, 8, 16, 16, 2

    x = jax.random.normal(ks[0], (N, Cin, H, W), jnp.float32)

    conv_params = []
    cin = Cin
    for l in range(nb_conv):
        w = jax.random.normal(ks[1 + 4 * l], (Cout, cin, KH, KW), jnp.float32) * 0.1
        b = jax.random.normal(ks[2 + 4 * l], (Cout,), jnp.float32) * 0.1
        gamma = 1.0 + 0.1 * jax.random.normal(ks[3 + 4 * l], (Cout,), jnp.float32)
        beta = 0.1 * jax.random.normal(ks[4 + 4 * l], (Cout,), jnp.float32)
        conv_params.append((w, b, gamma, beta))
        cin = Cout

    ref = _reference_forward(x, conv_params)

    # exact path (f32 MXU operands, f32 intermediate) -> tight check
    out_f32 = jax.block_until_ready(
        down_block_forward(x, conv_params, matmul_dtype=jnp.float32))
    assert out_f32.shape == (N, Cout, H // 2, W // 2), out_f32.shape
    err_f32 = float(jnp.max(jnp.abs(out_f32 - ref)))
    assert jnp.allclose(out_f32, ref, atol=1e-3, rtol=1e-3), err_f32

    # default fast path (bf16 MXU operands + bf16 intermediate) -> loose check
    out_bf = jax.block_until_ready(down_block_forward(x, conv_params))
    assert out_bf.shape == (N, Cout, H // 2, W // 2), out_bf.shape
    assert bool(jnp.all(jnp.isfinite(out_bf)))
    err_bf = float(jnp.max(jnp.abs(out_bf - ref)))
    assert jnp.allclose(out_bf, ref, atol=2.5e-1, rtol=2.5e-1), err_bf

    print("KERNEL_OK")
</pallas_src>

<mosaic_0001>
module attributes {stable_mosaic.version = 11 : i64} {
  func.func @_maxpool_kernel(%arg0: i32, %arg1: memref<16x2x8x2x4xf32, #tpu.memory_space<vmem>>, %arg2: memref<16x8x4xf32, #tpu.memory_space<vmem>>) attributes {dimension_semantics = [#tpu.dimension_semantics<parallel>], iteration_bounds = array<i64: 1>, scalar_prefetch = 0 : i64, scratch_operands = 0 : i64, tpu.core_type = #tpu.core_type<tc>, window_params = [{transform_indices = @transform_0, window_bounds = array<i64: 16, 2, 8, 2, 4>}, {transform_indices = @transform_1, window_bounds = array<i64: 16, 8, 4>}]} {
    %c0 = arith.constant 0 : index
    %c0_0 = arith.constant 0 : index
    %c0_1 = arith.constant 0 : index
    %c0_2 = arith.constant 0 : index
    %c0_3 = arith.constant 0 : index
    %0 = vector.load %arg1[%c0, %c0_0, %c0_1, %c0_2, %c0_3] : memref<16x2x8x2x4xf32, #tpu.memory_space<vmem>>, vector<16x2x8x2x4xf32>
    %cst = arith.constant dense<0xFF800000> : vector<16x2x8x4xf32>
    %1 = vector.multi_reduction <maximumf>, %0, %cst [3] : vector<16x2x8x2x4xf32> to vector<16x2x8x4xf32>
    %cst_4 = arith.constant dense<0xFF800000> : vector<16x8x4xf32>
    %2 = vector.multi_reduction <maximumf>, %1, %cst_4 [1] : vector<16x2x8x4xf32> to vector<16x8x4xf32>
    %c0_5 = arith.constant 0 : index
    %c0_6 = arith.constant 0 : index
    %c0_7 = arith.constant 0 : index
    %3 = vector.load %arg2[%c0_5, %c0_6, %c0_7] : memref<16x8x4xf32, #tpu.memory_space<vmem>>, vector<16x8x4xf32>
    tpu.vector_store %arg2[%c0_5, %c0_6, %c0_7], %2 {strides = array<i32>} : memref<16x8x4xf32, #tpu.memory_space<vmem>>, vector<16x8x4xf32>,
    return
  }
  func.func @transform_0(%arg0: i32) -> (i32, i32, i32, i32, i32) {
    %c0_i32 = arith.constant 0 : i32
    %c0_i32_0 = arith.constant 0 : i32
    %c0_i32_1 = arith.constant 0 : i32
    %c0_i32_2 = arith.constant 0 : i32
    %c0_i32_3 = arith.constant 0 : i32
    return %arg0, %c0_i32, %c0_i32_0, %c0_i32_1, %c0_i32_2 : i32, i32, i32, i32, i32
  }
  func.func @transform_1(%arg0: i32) -> (i32, i32, i32) {
    %c0_i32 = arith.constant 0 : i32
    %c0_i32_0 = arith.constant 0 : i32
    %c0_i32_1 = arith.constant 0 : i32
    return %arg0, %c0_i32, %c0_i32_0 : i32, i32, i32
  }
}

</mosaic_0001>

<llo_original>
// kernel: tpu_custom_call.1
$region0: #{tpu_custom_call.1}
  #allocation0 [shape = 'u32[]', space=smem, size = 0x4, offset = 0x4, fixed_abs, tag = 'smem constant byte address 0x4 - core index']
  #allocation1 [shape = 'u32[144,128]{1,0:T(1,128)}', space=vmem, size = 0x12000, scoped, tag = 'internal scratch']
  %s0 = inlined_call_operand.vmem [shape: f32[16,2,8,2,4], index: 0, kind: input, shape index: {}]
  %s1 = inlined_call_operand.vmem [shape: f32[16,8,4], index: 1, kind: output, shape index: {}]
  %s2 = sld [smem:[#allocation0]]
  $region14: #{tpu_custom_call.1} parent=0
    _
  %s4 = ssub.s32 1, %s2
  %s5 = scalar_select 0, %s4, %s2
  // Predicated region
  $region2: #{tpu_custom_call.1} parent=0 // pred_check
    _
  $region3: #{tpu_custom_call.1} parent=0 // pred_check_branch
    %7 = sbr.rel (0) target = $region5
  $region4: #{tpu_custom_call.1} parent=0 // pred_region
    _
  $region5: #{tpu_custom_call.1} parent=0 // pred_fallthru
    _
  %v8 = vld [vmem:[%s0] sm:$0x3]
  %v9 = vld [vmem:[%s0 + $0x2] sm:$0x3]
  %v10 = vld [vmem:[%s0 + $0x4] sm:$0x3]
  %v11 = vld [vmem:[%s0 + $0x6] sm:$0x3]
  %v12 = vld [vmem:[%s0 + $0x8] sm:$0x3]
  %v13 = vld [vmem:[%s0 + $0xa] sm:$0x3]
  %v14 = vld [vmem:[%s0 + $0xc] sm:$0x3]
  %v15 = vld [vmem:[%s0 + $0xe] sm:$0x3]
  %v16 = vld [vmem:[%s0 + $0x10] sm:$0x3]
  %v17 = vld [vmem:[%s0 + $0x12] sm:$0x3]
  %v18 = vld [vmem:[%s0 + $0x14] sm:$0x3]
  %v19 = vld [vmem:[%s0 + $0x16] sm:$0x3]
  %v20 = vld [vmem:[%s0 + $0x18] sm:$0x3]
  %v21 = vld [vmem:[%s0 + $0x1a] sm:$0x3]
  %v22 = vld [vmem:[%s0 + $0x1c] sm:$0x3]
  %v23 = vld [vmem:[%s0 + $0x1e] sm:$0x3]
  %v24 = vld [vmem:[%s0 + $0x20] sm:$0x3]
  %v25 = vld [vmem:[%s0 + $0x22] sm:$0x3]
  %v26 = vld [vmem:[%s0 + $0x24] sm:$0x3]
  %v27 = vld [vmem:[%s0 + $0x26] sm:$0x3]
  %v28 = vld [vmem:[%s0 + $0x28] sm:$0x3]
  %v29 = vld [vmem:[%s0 + $0x2a] sm:$0x3]
  %v30 = vld [vmem:[%s0 + $0x2c] sm:$0x3]
  %v31 = vld [vmem:[%s0 + $0x2e] sm:$0x3]
  %v32 = vld [vmem:[%s0 + $0x30] sm:$0x3]
  %v33 = vld [vmem:[%s0 + $0x32] sm:$0x3]
  %v34 = vld [vmem:[%s0 + $0x34] sm:$0x3]
  %v35 = vld [vmem:[%s0 + $0x36] sm:$0x3]
  %v36 = vld [vmem:[%s0 + $0x38] sm:$0x3]
  %v37 = vld [vmem:[%s0 + $0x3a] sm:$0x3]
  %v38 = vld [vmem:[%s0 + $0x3c] sm:$0x3]
  %v39 = vld [vmem:[%s0 + $0x3e] sm:$0x3]
  %v40 = vld [vmem:[%s0 + $0x40] sm:$0x3]
  %v41 = vld [vmem:[%s0 + $0x42] sm:$0x3]
  %v42 = vld [vmem:[%s0 + $0x44] sm:$0x3]
  %v43 = vld [vmem:[%s0 + $0x46] sm:$0x3]
  %v44 = vld [vmem:[%s0 + $0x48] sm:$0x3]
  %v45 = vld [vmem:[%s0 + $0x4a] sm:$0x3]
  %v46 = vld [vmem:[%s0 + $0x4c] sm:$0x3]
  %v47 = vld [vmem:[%s0 + $0x4e] sm:$0x3]
  %v48 = vld [vmem:[%s0 + $0x50] sm:$0x3]
  %v49 = vld [vmem:[%s0 + $0x52] sm:$0x3]
  %v50 = vld [vmem:[%s0 + $0x54] sm:$0x3]
  %v51 = vld [vmem:[%s0 + $0x56] sm:$0x3]
  %v52 = vld [vmem:[%s0 + $0x58] sm:$0x3]
  %v53 = vld [vmem:[%s0 + $0x5a] sm:$0x3]
  %v54 = vld [vmem:[%s0 + $0x5c] sm:$0x3]
  %v55 = vld [vmem:[%s0 + $0x5e] sm:$0x3]
  %v56 = vld [vmem:[%s0 + $0x60] sm:$0x3]
  %v57 = vld [vmem:[%s0 + $0x62] sm:$0x3]
  %v58 = vld [vmem:[%s0 + $0x64] sm:$0x3]
  %v59 = vld [vmem:[%s0 + $0x66] sm:$0x3]
  %v60 = vld [vmem:[%s0 + $0x68] sm:$0x3]
  %v61 = vld [vmem:[%s0 + $0x6a] sm:$0x3]
  %v62 = vld [vmem:[%s0 + $0x6c] sm:$0x3]
  %v63 = vld [vmem:[%s0 + $0x6e] sm:$0x3]
  %v64 = vld [vmem:[%s0 + $0x70] sm:$0x3]
  %v65 = vld [vmem:[%s0 + $0x72] sm:$0x3]
  %v66 = vld [vmem:[%s0 + $0x74] sm:$0x3]
  %v67 = vld [vmem:[%s0 + $0x76] sm:$0x3]
  %v68 = vld [vmem:[%s0 + $0x78] sm:$0x3]
  %v69 = vld [vmem:[%s0 + $0x7a] sm:$0x3]
  %v70 = vld [vmem:[%s0 + $0x7c] sm:$0x3]
  %v71 = vld [vmem:[%s0 + $0x7e] sm:$0x3]
  %v72 = vld [vmem:[%s0 + $0x80] sm:$0x3]
  %v73 = vld [vmem:[%s0 + $0x82] sm:$0x3]
  %v74 = vld [vmem:[%s0 + $0x84] sm:$0x3]
  %v75 = vld [vmem:[%s0 + $0x86] sm:$0x3]
  %v76 = vld [vmem:[%s0 + $0x88] sm:$0x3]
  %v77 = vld [vmem:[%s0 + $0x8a] sm:$0x3]
  %v78 = vld [vmem:[%s0 + $0x8c] sm:$0x3]
  %v79 = vld [vmem:[%s0 + $0x8e] sm:$0x3]
  %v80 = vld [vmem:[%s0 + $0x90] sm:$0x3]
  %v81 = vld [vmem:[%s0 + $0x92] sm:$0x3]
  %v82 = vld [vmem:[%s0 + $0x94] sm:$0x3]
  %v83 = vld [vmem:[%s0 + $0x96] sm:$0x3]
  %v84 = vld [vmem:[%s0 + $0x98] sm:$0x3]
  %v85 = vld [vmem:[%s0 + $0x9a] sm:$0x3]
  %v86 = vld [vmem:[%s0 + $0x9c] sm:$0x3]
  %v87 = vld [vmem:[%s0 + $0x9e] sm:$0x3]
  %v88 = vld [vmem:[%s0 + $0xa0] sm:$0x3]
  %v89 = vld [vmem:[%s0 + $0xa2] sm:$0x3]
  %v90 = vld [vmem:[%s0 + $0xa4] sm:$0x3]
  %v91 = vld [vmem:[%s0 + $0xa6] sm:$0x3]
  %v92 = vld [vmem:[%s0 + $0xa8] sm:$0x3]
  %v93 = vld [vmem:[%s0 + $0xaa] sm:$0x3]
  %v94 = vld [vmem:[%s0 + $0xac] sm:$0x3]
  %v95 = vld [vmem:[%s0 + $0xae] sm:$0x3]
  %v96 = vld [vmem:[%s0 + $0xb0] sm:$0x3]
  %v97 = vld [vmem:[%s0 + $0xb2] sm:$0x3]
  %v98 = vld [vmem:[%s0 + $0xb4] sm:$0x3]
  %v99 = vld [vmem:[%s0 + $0xb6] sm:$0x3]
  %v100 = vld [vmem:[%s0 + $0xb8] sm:$0x3]
  %v101 = vld [vmem:[%s0 + $0xba] sm:$0x3]
  %v102 = vld [vmem:[%s0 + $0xbc] sm:$0x3]
  %v103 = vld [vmem:[%s0 + $0xbe] sm:$0x3]
  %v104 = vld [vmem:[%s0 + $0xc0] sm:$0x3]
  %v105 = vld [vmem:[%s0 + $0xc2] sm:$0x3]
  %v106 = vld [vmem:[%s0 + $0xc4] sm:$0x3]
  %v107 = vld [vmem:[%s0 + $0xc6] sm:$0x3]
  %v108 = vld [vmem:[%s0 + $0xc8] sm:$0x3]
  %v109 = vld [vmem:[%s0 + $0xca] sm:$0x3]
  %v110 = vld [vmem:[%s0 + $0xcc] sm:$0x3]
  %v111 = vld [vmem:[%s0 + $0xce] sm:$0x3]
  %v112 = vld [vmem:[%s0 + $0xd0] sm:$0x3]
  %v113 = vld [vmem:[%s0 + $0xd2] sm:$0x3]
  %v114 = vld [vmem:[%s0 + $0xd4] sm:$0x3]
  %v115 = vld [vmem:[%s0 + $0xd6] sm:$0x3]
  %v116 = vld [vmem:[%s0 + $0xd8] sm:$0x3]
  %v117 = vld [vmem:[%s0 + $0xda] sm:$0x3]
  %v118 = vld [vmem:[%s0 + $0xdc] sm:$0x3]
  %v119 = vld [vmem:[%s0 + $0xde] sm:$0x3]
  %v120 = vld [vmem:[%s0 + $0xe0] sm:$0x3]
  %v121 = vld [vmem:[%s0 + $0xe2] sm:$0x3]
  %v122 = vld [vmem:[%s0 + $0xe4] sm:$0x3]
  %v123 = vld [vmem:[%s0 + $0xe6] sm:$0x3]
  %v124 = vld [vmem:[%s0 + $0xe8] sm:$0x3]
  %v125 = vld [vmem:[%s0 + $0xea] sm:$0x3]
  %v126 = vld [vmem:[%s0 + $0xec] sm:$0x3]
  %v127 = vld [vmem:[%s0 + $0xee] sm:$0x3]
  %v128 = vld [vmem:[%s0 + $0xf0] sm:$0x3]
  %v129 = vld [vmem:[%s0 + $0xf2] sm:$0x3]
  %v130 = vld [vmem:[%s0 + $0xf4] sm:$0x3]
  %v131 = vld [vmem:[%s0 + $0xf6] sm:$0x3]
  %v132 = vld [vmem:[%s0 + $0xf8] sm:$0x3]
  %v133 = vld [vmem:[%s0 + $0xfa] sm:$0x3]
  %v134 = vld [vmem:[%s0 + $0xfc] sm:$0x3]
  %v135 = vld [vmem:[%s0 + $0xfe] sm:$0x3]
  %v136 = vld [vmem:[%s0 + $0x100] sm:$0x3]
  %v137 = vld [vmem:[%s0 + $0x102] sm:$0x3]
  %v138 = vld [vmem:[%s0 + $0x104] sm:$0x3]
  %v139 = vld [vmem:[%s0 + $0x106] sm:$0x3]
  %v140 = vld [vmem:[%s0 + $0x108] sm:$0x3]
  %v141 = vld [vmem:[%s0 + $0x10a] sm:$0x3]
  %v142 = vld [vmem:[%s0 + $0x10c] sm:$0x3]
  %v143 = vld [vmem:[%s0 + $0x10e] sm:$0x3]
  %v144 = vld [vmem:[%s0 + $0x110] sm:$0x3]
  %v145 = vld [vmem:[%s0 + $0x112] sm:$0x3]
  %v146 = vld [vmem:[%s0 + $0x114] sm:$0x3]
  %v147 = vld [vmem:[%s0 + $0x116] sm:$0x3]
  %v148 = vld [vmem:[%s0 + $0x118] sm:$0x3]
  %v149 = vld [vmem:[%s0 + $0x11a] sm:$0x3]
  %v150 = vld [vmem:[%s0 + $0x11c] sm:$0x3]
  %v151 = vld [vmem:[%s0 + $0x11e] sm:$0x3]
  %v152 = vld [vmem:[%s0 + $0x120] sm:$0x3]
  %v153 = vld [vmem:[%s0 + $0x122] sm:$0x3]
  %v154 = vld [vmem:[%s0 + $0x124] sm:$0x3]
  %v155 = vld [vmem:[%s0 + $0x126] sm:$0x3]
  %v156 = vld [vmem:[%s0 + $0x128] sm:$0x3]
  %v157 = vld [vmem:[%s0 + $0x12a] sm:$0x3]
  %v158 = vld [vmem:[%s0 + $0x12c] sm:$0x3]
  %v159 = vld [vmem:[%s0 + $0x12e] sm:$0x3]
  %v160 = vld [vmem:[%s0 + $0x130] sm:$0x3]
  %v161 = vld [vmem:[%s0 + $0x132] sm:$0x3]
  %v162 = vld [vmem:[%s0 + $0x134] sm:$0x3]
  %v163 = vld [vmem:[%s0 + $0x136] sm:$0x3]
  %v164 = vld [vmem:[%s0 + $0x138] sm:$0x3]
  %v165 = vld [vmem:[%s0 + $0x13a] sm:$0x3]
  %v166 = vld [vmem:[%s0 + $0x13c] sm:$0x3]
  %v167 = vld [vmem:[%s0 + $0x13e] sm:$0x3]
  %v168 = vld [vmem:[%s0 + $0x140] sm:$0x3]
  %v169 = vld [vmem:[%s0 + $0x142] sm:$0x3]
  %v170 = vld [vmem:[%s0 + $0x144] sm:$0x3]
  %v171 = vld [vmem:[%s0 + $0x146] sm:$0x3]
  %v172 = vld [vmem:[%s0 + $0x148] sm:$0x3]
  %v173 = vld [vmem:[%s0 + $0x14a] sm:$0x3]
  %v174 = vld [vmem:[%s0 + $0x14c] sm:$0x3]
  %v175 = vld [vmem:[%s0 + $0x14e] sm:$0x3]
  %v176 = vld [vmem:[%s0 + $0x150] sm:$0x3]
  %v177 = vld [vmem:[%s0 + $0x152] sm:$0x3]
  %v178 = vld [vmem:[%s0 + $0x154] sm:$0x3]
  %v179 = vld [vmem:[%s0 + $0x156] sm:$0x3]
  %v180 = vld [vmem:[%s0 + $0x158] sm:$0x3]
  %v181 = vld [vmem:[%s0 + $0x15a] sm:$0x3]
  %v182 = vld [vmem:[%s0 + $0x15c] sm:$0x3]
  %v183 = vld [vmem:[%s0 + $0x15e] sm:$0x3]
  %v184 = vld [vmem:[%s0 + $0x160] sm:$0x3]
  %v185 = vld [vmem:[%s0 + $0x162] sm:$0x3]
  %v186 = vld [vmem:[%s0 + $0x164] sm:$0x3]
  %v187 = vld [vmem:[%s0 + $0x166] sm:$0x3]
  %v188 = vld [vmem:[%s0 + $0x168] sm:$0x3]
  %v189 = vld [vmem:[%s0 + $0x16a] sm:$0x3]
  %v190 = vld [vmem:[%s0 + $0x16c] sm:$0x3]
  %v191 = vld [vmem:[%s0 + $0x16e] sm:$0x3]
  %v192 = vld [vmem:[%s0 + $0x170] sm:$0x3]
  %v193 = vld [vmem:[%s0 + $0x172] sm:$0x3]
  %v194 = vld [vmem:[%s0 + $0x174] sm:$0x3]
  %v195 = vld [vmem:[%s0 + $0x176] sm:$0x3]
  %v196 = vld [vmem:[%s0 + $0x178] sm:$0x3]
  %v197 = vld [vmem:[%s0 + $0x17a] sm:$0x3]
  %v198 = vld [vmem:[%s0 + $0x17c] sm:$0x3]
  %v199 = vld [vmem:[%s0 + $0x17e] sm:$0x3]
  %v200 = vld [vmem:[%s0 + $0x180] sm:$0x3]
  %v201 = vld [vmem:[%s0 + $0x182] sm:$0x3]
  %v202 = vld [vmem:[%s0 + $0x184] sm:$0x3]
  %v203 = vld [vmem:[%s0 + $0x186] sm:$0x3]
  %v204 = vld [vmem:[%s0 + $0x188] sm:$0x3]
  %v205 = vld [vmem:[%s0 + $0x18a] sm:$0x3]
  %v206 = vld [vmem:[%s0 + $0x18c] sm:$0x3]
  %v207 = vld [vmem:[%s0 + $0x18e] sm:$0x3]
  %v208 = vld [vmem:[%s0 + $0x190] sm:$0x3]
  %v209 = vld [vmem:[%s0 + $0x192] sm:$0x3]
  %v210 = vld [vmem:[%s0 + $0x194] sm:$0x3]
  %v211 = vld [vmem:[%s0 + $0x196] sm:$0x3]
  %v212 = vld [vmem:[%s0 + $0x198] sm:$0x3]
  %v213 = vld [vmem:[%s0 + $0x19a] sm:$0x3]
  %v214 = vld [vmem:[%s0 + $0x19c] sm:$0x3]
  %v215 = vld [vmem:[%s0 + $0x19e] sm:$0x3]
  %v216 = vld [vmem:[%s0 + $0x1a0] sm:$0x3]
  %v217 = vld [vmem:[%s0 + $0x1a2] sm:$0x3]
  %v218 = vld [vmem:[%s0 + $0x1a4] sm:$0x3]
  %v219 = vld [vmem:[%s0 + $0x1a6] sm:$0x3]
  %v220 = vld [vmem:[%s0 + $0x1a8] sm:$0x3]
  %v221 = vld [vmem:[%s0 + $0x1aa] sm:$0x3]
  %v222 = vld [vmem:[%s0 + $0x1ac] sm:$0x3]
  %v223 = vld [vmem:[%s0 + $0x1ae] sm:$0x3]
  %v224 = vld [vmem:[%s0 + $0x1b0] sm:$0x3]
  %v225 = vld [vmem:[%s0 + $0x1b2] sm:$0x3]
  %v226 = vld [vmem:[%s0 + $0x1b4] sm:$0x3]
  %v227 = vld [vmem:[%s0 + $0x1b6] sm:$0x3]
  %v228 = vld [vmem:[%s0 + $0x1b8] sm:$0x3]
  %v229 = vld [vmem:[%s0 + $0x1ba] sm:$0x3]
  %v230 = vld [vmem:[%s0 + $0x1bc] sm:$0x3]
  %v231 = vld [vmem:[%s0 + $0x1be] sm:$0x3]
  %v232 = vld [vmem:[%s0 + $0x1c0] sm:$0x3]
  %v233 = vld [vmem:[%s0 + $0x1c2] sm:$0x3]
  %v234 = vld [vmem:[%s0 + $0x1c4] sm:$0x3]
  %v235 = vld [vmem:[%s0 + $0x1c6] sm:$0x3]
  %v236 = vld [vmem:[%s0 + $0x1c8] sm:$0x3]
  %v237 = vld [vmem:[%s0 + $0x1ca] sm:$0x3]
  %v238 = vld [vmem:[%s0 + $0x1cc] sm:$0x3]
  %v239 = vld [vmem:[%s0 + $0x1ce] sm:$0x3]
  %v240 = vld [vmem:[%s0 + $0x1d0] sm:$0x3]
  %v241 = vld [vmem:[%s0 + $0x1d2] sm:$0x3]
  %v242 = vld [vmem:[%s0 + $0x1d4] sm:$0x3]
  %v243 = vld [vmem:[%s0 + $0x1d6] sm:$0x3]
  %v244 = vld [vmem:[%s0 + $0x1d8] sm:$0x3]
  %v245 = vld [vmem:[%s0 + $0x1da] sm:$0x3]
  %v246 = vld [vmem:[%s0 + $0x1dc] sm:$0x3]
  %v247 = vld [vmem:[%s0 + $0x1de] sm:$0x3]
  %v248 = vld [vmem:[%s0 + $0x1e0] sm:$0x3]
  %v249 = vld [vmem:[%s0 + $0x1e2] sm:$0x3]
  %v250 = vld [vmem:[%s0 + $0x1e4] sm:$0x3]
  %v251 = vld [vmem:[%s0 + $0x1e6] sm:$0x3]
  %v252 = vld [vmem:[%s0 + $0x1e8] sm:$0x3]
  %v253 = vld [vmem:[%s0 + $0x1ea] sm:$0x3]
  %v254 = vld [vmem:[%s0 + $0x1ec] sm:$0x3]
  %v255 = vld [vmem:[%s0 + $0x1ee] sm:$0x3]
  %v256 = vld [vmem:[%s0 + $0x1f0] sm:$0x3]
  %v257 = vld [vmem:[%s0 + $0x1f2] sm:$0x3]
  %v258 = vld [vmem:[%s0 + $0x1f4] sm:$0x3]
  %v259 = vld [vmem:[%s0 + $0x1f6] sm:$0x3]
  %v260 = vld [vmem:[%s0 + $0x1f8] sm:$0x3]
  %v261 = vld [vmem:[%s0 + $0x1fa] sm:$0x3]
  %v262 = vld [vmem:[%s0 + $0x1fc] sm:$0x3]
  %v263 = vld [vmem:[%s0 + $0x1fe] sm:$0x3]
  %vm264 = vcmask 25600
  %v265 = vsel %vm264, %v8, -inf
  %v266 = vrot.slane %v265, 4
  %v267 = vmax.f32 %v265, %v266
  %v268 = vrot.slane %v267, 2
  %v269 = vmax.f32 %v267, %v268
  %v270 = vrot.slane %v269, 1
  %v271 = vmax.f32 %v269, %v270
  %v272 = vsel %vm264, %v9, -inf
  %v273 = vrot.slane %v272, 4
  %v274 = vmax.f32 %v272, %v273
  %v275 = vrot.slane %v274, 2
  %v276 = vmax.f32 %v274, %v275
  %v277 = vrot.slane %v276, 1
  %v278 = vmax.f32 %v276, %v277
  %v279 = vsel %vm264, %v10, -inf
  %v280 = vrot.slane %v279, 4
  %v281 = vmax.f32 %v279, %v280
  %v282 = vrot.slane %v281, 2
  %v283 = vmax.f32 %v281, %v282
  %v284 = vrot.slane %v283, 1
  %v285 = vmax.f32 %v283, %v284
  %v286 = vsel %vm264, %v11, -inf
  %v287 = vrot.slane %v286, 4
  %v288 = vmax.f32 %v286, %v287
  %v289 = vrot.slane %v288, 2
  %v290 = vmax.f32 %v288, %v289
  %v291 = vrot.slane %v290, 1
  %v292 = vmax.f32 %v290, %v291
  %v293 = vsel %vm264, %v12, -inf
  %v294 = vrot.slane %v293, 4
  %v295 = vmax.f32 %v293, %v294
  %v296 = vrot.slane %v295, 2
  %v297 = vmax.f32 %v295, %v296
  %v298 = vrot.slane %v297, 1
  %v299 = vmax.f32 %v297, %v298
  %v300 = vsel %vm264, %v13, -inf
  %v301 = vrot.slane %v300, 4
  %v302 = vmax.f32 %v300, %v301
  %v303 = vrot.slane %v302, 2
  %v304 = vmax.f32 %v302, %v303
  %v305 = vrot.slane %v304, 1
  %v306 = vmax.f32 %v304, %v305
  %v307 = vsel %vm264, %v14, -inf
  %v308 = vrot.slane %v307, 4
  %v309 = vmax.f32 %v307, %v308
  %v310 = vrot.slane %v309, 2
  %v311 = vmax.f32 %v309, %v310
  %v312 = vrot.slane %v311, 1
  %v313 = vmax.f32 %v311, %v312
  %v314 = vsel %vm264, %v15, -inf
  %v315 = vrot.slane %v314, 4
  %v316 = vmax.f32 %v314, %v315
  %v317 = vrot.slane %v316, 2
  %v318 = vmax.f32 %v316, %v317
  %v319 = vrot.slane %v318, 1
  %v320 = vmax.f32 %v318, %v319
  %v321 = vsel %vm264, %v16, -inf
  %v322 = vrot.slane %v321, 4
  %v323 = vmax.f32 %v321, %v322
  %v324 = vrot.slane %v323, 2
  %v325 = vmax.f32 %v323, %v324
  %v326 = vrot.slane %v325, 1
  %v327 = vmax.f32 %v325, %v326
  %v328 = vsel %vm264, %v17, -inf
  %v329 = vrot.slane %v328, 4
  %v330 = vmax.f32 %v328, %v329
  %v331 = vrot.slane %v330, 2
  %v332 = vmax.f32 %v330, %v331
  %v333 = vrot.slane %v332, 1
  %v334 = vmax.f32 %v332, %v333
  %v335 = vsel %vm264, %v18, -inf
  %v336 = vrot.slane %v335, 4
  %v337 = vmax.f32 %v335, %v336
  %v338 = vrot.slane %v337, 2
  %v339 = vmax.f32 %v337, %v338
  %v340 = vrot.slane %v339, 1
  %v341 = vmax.f32 %v339, %v340
  %v342 = vsel %vm264, %v19, -inf
  %v343 = vrot.slane %v342, 4
  %v344 = vmax.f32 %v342, %v343
  %v345 = vrot.slane %v344, 2
  %v346 = vmax.f32 %v344, %v345
  %v347 = vrot.slane %v346, 1
  %v348 = vmax.f32 %v346, %v347
  %v349 = vsel %vm264, %v20, -inf
  %v350 = vrot.slane %v349, 4
  %v351 = vmax.f32 %v349, %v350
  %v352 = vrot.slane %v351, 2
  %v353 = vmax.f32 %v351, %v352
  %v354 = vrot.slane %v353, 1
  %v355 = vmax.f32 %v353, %v354
  %v356 = vsel %vm264, %v21, -inf
  %v357 = vrot.slane %v356, 4
  %v358 = vmax.f32 %v356, %v357
  %v359 = vrot.slane %v358, 2
  %v360 = vmax.f32 %v358, %v359
  %v361 = vrot.slane %v360, 1
  %v362 = vmax.f32 %v360, %v361
  %v363 = vsel %vm264, %v22, -inf
  %v364 = vrot.slane %v363, 4
  %v365 = vmax.f32 %v363, %v364
  %v366 = vrot.slane %v365, 2
  %v367 = vmax.f32 %v365, %v366
  %v368 = vrot.slane %v367, 1
  %v369 = vmax.f32 %v367, %v368
  %v370 = vsel %vm264, %v23, -inf
  %v371 = vrot.slane %v370, 4
  %v372 = vmax.f32 %v370, %v371
  %v373 = vrot.slane %v372, 2
  %v374 = vmax.f32 %v372, %v373
  %v375 = vrot.slane %v374, 1
  %v376 = vmax.f32 %v374, %v375
  %v377 = vsel %vm264, %v24, -inf
  %v378 = vrot.slane %v377, 4
  %v379 = vmax.f32 %v377, %v378
  %v380 = vrot.slane %v379, 2
  %v381 = vmax.f32 %v379, %v380
  %v382 = vrot.slane %v381, 1
  %v383 = vmax.f32 %v381, %v382
  %v384 = vsel %vm264, %v25, -inf
  %v385 = vrot.slane %v384, 4
  %v386 = vmax.f32 %v384, %v385
  %v387 = vrot.slane %v386, 2
  %v388 = vmax.f32 %v386, %v387
  %v389 = vrot.slane %v388, 1
  %v390 = vmax.f32 %v388, %v389
  %v391 = vsel %vm264, %v26, -inf
  %v392 = vrot.slane %v391, 4
  %v393 = vmax.f32 %v391, %v392
  %v394 = vrot.slane %v393, 2
  %v395 = vmax.f32 %v393, %v394
  %v396 = vrot.slane %v395, 1
  %v397 = vmax.f32 %v395, %v396
  %v398 = vsel %vm264, %v27, -inf
  %v399 = vrot.slane %v398, 4
  %v400 = vmax.f32 %v398, %v399
  %v401 = vrot.slane %v400, 2
  %v402 = vmax.f32 %v400, %v401
  %v403 = vrot.slane %v402, 1
  %v404 = vmax.f32 %v402, %v403
  %v405 = vsel %vm264, %v28, -inf
  %v406 = vrot.slane %v405, 4
  %v407 = vmax.f32 %v405, %v406
  %v408 = vrot.slane %v407, 2
  %v409 = vmax.f32 %v407, %v408
  %v410 = vrot.slane %v409, 1
  %v411 = vmax.f32 %v409, %v410
  %v412 = vsel %vm264, %v29, -inf
  %v413 = vrot.slane %v412, 4
  %v414 = vmax.f32 %v412, %v413
  %v415 = vrot.slane %v414, 2
  %v416 = vmax.f32 %v414, %v415
  %v417 = vrot.slane %v416, 1
  %v418 = vmax.f32 %v416, %v417
  %v419 = vsel %vm264, %v30, -inf
  %v420 = vrot.slane %v419, 4
  %v421 = vmax.f32 %v419, %v420
  %v422 = vrot.slane %v421, 2
  %v423 = vmax.f32 %v421, %v422
  %v424 = vrot.slane %v423, 1
  %v425 = vmax.f32 %v423, %v424
  %v426 = vsel %vm264, %v31, -inf
  %v427 = vrot.slane %v426, 4
  %v428 = vmax.f32 %v426, %v427
  %v429 = vrot.slane %v428, 2
  %v430 = vmax.f32 %v428, %v429
  %v431 = vrot.slane %v430, 1
  %v432 = vmax.f32 %v430, %v431
  %v433 = vsel %vm264, %v32, -inf
  %v434 = vrot.slane %v433, 4
  %v435 = vmax.f32 %v433, %v434
  %v436 = vrot.slane %v435, 2
  %v437 = vmax.f32 %v435, %v436
  %v438 = vrot.slane %v437, 1
  %v439 = vmax.f32 %v437, %v438
  %v440 = vsel %vm264, %v33, -inf
  %v441 = vrot.slane %v440, 4
  %v442 = vmax.f32 %v440, %v441
  %v443 = vrot.slane %v442, 2
  %v444 = vmax.f32 %v442, %v443
  %v445 = vrot.slane %v444, 1
  %v446 = vmax.f32 %v444, %v445
  %v447 = vsel %vm264, %v34, -inf
  %v448 = vrot.slane %v447, 4
  %v449 = vmax.f32 %v447, %v448
  %v450 = vrot.slane %v449, 2
  %v451 = vmax.f32 %v449, %v450
  %v452 = vrot.slane %v451, 1
  %v453 = vmax.f32 %v451, %v452
  %v454 = vsel %vm264, %v35, -inf
  %v455 = vrot.slane %v454, 4
  %v456 = vmax.f32 %v454, %v455
  %v457 = vrot.slane %v456, 2
  %v458 = vmax.f32 %v456, %v457
  %v459 = vrot.slane %v458, 1
  %v460 = vmax.f32 %v458, %v459
  %v461 = vsel %vm264, %v36, -inf
  %v462 = vrot.slane %v461, 4
  %v463 = vmax.f32 %v461, %v462
  %v464 = vrot.slane %v463, 2
  %v465 = vmax.f32 %v463, %v464
  %v466 = vrot.slane %v465, 1
  %v467 = vmax.f32 %v465, %v466
  %v468 = vsel %vm264, %v37, -inf
  %v469 = vrot.slane %v468, 4
  %v470 = vmax.f32 %v468, %v469
  %v471 = vrot.slane %v470, 2
  %v472 = vmax.f32 %v470, %v471
  %v473 = vrot.slane %v472, 1
  %v474 = vmax.f32 %v472, %v473
  %v475 = vsel %vm264, %v38, -inf
  %v476 = vrot.slane %v475, 4
  %v477 = vmax.f32 %v475, %v476
  %v478 = vrot.slane %v477, 2
  %v479 = vmax.f32 %v477, %v478
  %v480 = vrot.slane %v479, 1
  %v481 = vmax.f32 %v479, %v480
  %v482 = vsel %vm264, %v39, -inf
  %v483 = vrot.slane %v482, 4
  %v484 = vmax.f32 %v482, %v483
  %v485 = vrot.slane %v484, 2
  %v486 = vmax.f32 %v484, %v485
  %v487 = vrot.slane %v486, 1
  %v488 = vmax.f32 %v486, %v487
  %v489 = vsel %vm264, %v40, -inf
  %v490 = vrot.slane %v489, 4
  %v491 = vmax.f32 %v489, %v490
  %v492 = vrot.slane %v491, 2
  %v493 = vmax.f32 %v491, %v492
  %v494 = vrot.slane %v493, 1
  %v495 = vmax.f32 %v493, %v494
  %v496 = vsel %vm264, %v41, -inf
  %v497 = vrot.slane %v496, 4
  %v498 = vmax.f32 %v496, %v497
  %v499 = vrot.slane %v498, 2
  %v500 = vmax.f32 %v498, %v499
  %v501 = vrot.slane %v500, 1
  %v502 = vmax.f32 %v500, %v501
  %v503 = vsel %vm264, %v42, -inf
  %v504 = vrot.slane %v503, 4
  %v505 = vmax.f32 %v503, %v504
  %v506 = vrot.slane %v505, 2
  %v507 = vmax.f32 %v505, %v506
  %v508 = vrot.slane %v507, 1
  %v509 = vmax.f32 %v507, %v508
  %v510 = vsel %vm264, %v43, -inf
  %v511 = vrot.slane %v510, 4
  %v512 = vmax.f32 %v510, %v511
  %v513 = vrot.slane %v512, 2
  %v514 = vmax.f32 %v512, %v513
  %v515 = vrot.slane %v514, 1
  %v516 = vmax.f32 %v514, %v515
  %v517 = vsel %vm264, %v44, -inf
  %v518 = vrot.slane %v517, 4
  %v519 = vmax.f32 %v517, %v518
  %v520 = vrot.slane %v519, 2
  %v521 = vmax.f32 %v519, %v520
  %v522 = vrot.slane %v521, 1
  %v523 = vmax.f32 %v521, %v522
  %v524 = vsel %vm264, %v45, -inf
  %v525 = vrot.slane %v524, 4
  %v526 = vmax.f32 %v524, %v525
  %v527 = vrot.slane %v526, 2
  %v528 = vmax.f32 %v526, %v527
  %v529 = vrot.slane %v528, 1
  %v530 = vmax.f32 %v528, %v529
  %v531 = vsel %vm264, %v46, -inf
  %v532 = vrot.slane %v531, 4
  %v533 = vmax.f32 %v531, %v532
  %v534 = vrot.slane %v533, 2
  %v535 = vmax.f32 %v533, %v534
  %v536 = vrot.slane %v535, 1
  %v537 = vmax.f32 %v535, %v536
  %v538 = vsel %vm264, %v47, -inf
  %v539 = vrot.slane %v538, 4
  %v540 = vmax.f32 %v538, %v539
  %v541 = vrot.slane %v540, 2
  %v542 = vmax.f32 %v540, %v541
  %v543 = vrot.slane %v542, 1
  %v544 = vmax.f32 %v542, %v543
  %v545 = vsel %vm264, %v48, -inf
  %v546 = vrot.slane %v545, 4
  %v547 = vmax.f32 %v545, %v546
  %v548 = vrot.slane %v547, 2
  %v549 = vmax.f32 %v547, %v548
  %v550 = vrot.slane %v549, 1
  %v551 = vmax.f32 %v549, %v550
  %v552 = vsel %vm264, %v49, -inf
  %v553 = vrot.slane %v552, 4
  %v554 = vmax.f32 %v552, %v553
  %v555 = vrot.slane %v554, 2
  %v556 = vmax.f32 %v554, %v555
  %v557 = vrot.slane %v556, 1
  %v558 = vmax.f32 %v556, %v557
  %v559 = vsel %vm264, %v50, -inf
  %v560 = vrot.slane %v559, 4
  %v561 = vmax.f32 %v559, %v560
  %v562 = vrot.slane %v561, 2
  %v563 = vmax.f32 %v561, %v562
  %v564 = vrot.slane %v563, 1
  %v565 = vmax.f32 %v563, %v564
  %v566 = vsel %vm264, %v51, -inf
  %v567 = vrot.slane %v566, 4
  %v568 = vmax.f32 %v566, %v567
  %v569 = vrot.slane %v568, 2
  %v570 = vmax.f32 %v568, %v569
  %v571 = vrot.slane %v570, 1
  %v572 = vmax.f32 %v570, %v571
  %v573 = vsel %vm264, %v52, -inf
  %v574 = vrot.slane %v573, 4
  %v575 = vmax.f32 %v573, %v574
  %v576 = vrot.slane %v575, 2
  %v577 = vmax.f32 %v575, %v576
  %v578 = vrot.slane %v577, 1
  %v579 = vmax.f32 %v577, %v578
  %v580 = vsel %vm264, %v53, -inf
  %v581 = vrot.slane %v580, 4
  %v582 = vmax.f32 %v580, %v581
  %v583 = vrot.slane %v582, 2
  %v584 = vmax.f32 %v582, %v583
  %v585 = vrot.slane %v584, 1
  %v586 = vmax.f32 %v584, %v585
  %v587 = vsel %vm264, %v54, -inf
  %v588 = vrot.slane %v587, 4
  %v589 = vmax.f32 %v587, %v588
  %v590 = vrot.slane %v589, 2
  %v591 = vmax.f32 %v589, %v590
  %v592 = vrot.slane %v591, 1
  %v593 = vmax.f32 %v591, %v592
  %v594 = vsel %vm264, %v55, -inf
  %v595 = vrot.slane %v594, 4
  %v596 = vmax.f32 %v594, %v595
  %v597 = vrot.slane %v596, 2
  %v598 = vmax.f32 %v596, %v597
  %v599 = vrot.slane %v598, 1
  %v600 = vmax.f32 %v598, %v599
  %v601 = vsel %vm264, %v56, -inf
  %v602 = vrot.slane %v601, 4
  %v603 = vmax.f32 %v601, %v602
  %v604 = vrot.slane %v603, 2
  %v605 = vmax.f32 %v603, %v604
  %v606 = vrot.slane %v605, 1
  %v607 = vmax.f32 %v605, %v606
  %v608 = vsel %vm264, %v57, -inf
  %v609 = vrot.slane %v608, 4
  %v610 = vmax.f32 %v608, %v609
  %v611 = vrot.slane %v610, 2
  %v612 = vmax.f32 %v610, %v611
  %v613 = vrot.slane %v612, 1
  %v614 = vmax.f32 %v612, %v613
  %v615 = vsel %vm264, %v58, -inf
  %v616 = vrot.slane %v615, 4
  %v617 = vmax.f32 %v615, %v616
  %v618 = vrot.slane %v617, 2
  %v619 = vmax.f32 %v617, %v618
  %v620 = vrot.slane %v619, 1
  %v621 = vmax.f32 %v619, %v620
  %v622 = vsel %vm264, %v59, -inf
  %v623 = vrot.slane %v622, 4
  %v624 = vmax.f32 %v622, %v623
  %v625 = vrot.slane %v624, 2
  %v626 = vmax.f32 %v624, %v625
  %v627 = vrot.slane %v626, 1
  %v628 = vmax.f32 %v626, %v627
  %v629 = vsel %vm264, %v60, -inf
  %v630 = vrot.slane %v629, 4
  %v631 = vmax.f32 %v629, %v630
  %v632 = vrot.slane %v631, 2
  %v633 = vmax.f32 %v631, %v632
  %v634 = vrot.slane %v633, 1
  %v635 = vmax.f32 %v633, %v634
  %v636 = vsel %vm264, %v61, -inf
  %v637 = vrot.slane %v636, 4
  %v638 = vmax.f32 %v636, %v637
  %v639 = vrot.slane %v638, 2
  %v640 = vmax.f32 %v638, %v639
  %v641 = vrot.slane %v640, 1
  %v642 = vmax.f32 %v640, %v641
  %v643 = vsel %vm264, %v62, -inf
  %v644 = vrot.slane %v643, 4
  %v645 = vmax.f32 %v643, %v644
  %v646 = vrot.slane %v645, 2
  %v647 = vmax.f32 %v645, %v646
  %v648 = vrot.slane %v647, 1
  %v649 = vmax.f32 %v647, %v648
  %v650 = vsel %vm264, %v63, -inf
  %v651 = vrot.slane %v650, 4
  %v652 = vmax.f32 %v650, %v651
  %v653 = vrot.slane %v652, 2
  %v654 = vmax.f32 %v652, %v653
  %v655 = vrot.slane %v654, 1
  %v656 = vmax.f32 %v654, %v655
  %v657 = vsel %vm264, %v64, -inf
  %v658 = vrot.slane %v657, 4
  %v659 = vmax.f32 %v657, %v658
  %v660 = vrot.slane %v659, 2
  %v661 = vmax.f32 %v659, %v660
  %v662 = vrot.slane %v661, 1
  %v663 = vmax.f32 %v661, %v662
  %v664 = vsel %vm264, %v65, -inf
  %v665 = vrot.slane %v664, 4
  %v666 = vmax.f32 %v664, %v665
  %v667 = vrot.slane %v666, 2
  %v668 = vmax.f32 %v666, %v667
  %v669 = vrot.slane %v668, 1
  %v670 = vmax.f32 %v668, %v669
  %v671 = vsel %vm264, %v66, -inf
  %v672 = vrot.slane %v671, 4
  %v673 = vmax.f32 %v671, %v672
  %v674 = vrot.slane %v673, 2
  %v675 = vmax.f32 %v673, %v674
  %v676 = vrot.slane %v675, 1
  %v677 = vmax.f32 %v675, %v676
  %v678 = vsel %vm264, %v67, -inf
  %v679 = vrot.slane %v678, 4
  %v680 = vmax.f32 %v678, %v679
  %v681 = vrot.slane %v680, 2
  %v682 = vmax.f32 %v680, %v681
  %v683 = vrot.slane %v682, 1
  %v684 = vmax.f32 %v682, %v683
  %v685 = vsel %vm264, %v68, -inf
  %v686 = vrot.slane %v685, 4
  %v687 = vmax.f32 %v685, %v686
  %v688 = vrot.slane %v687, 2
  %v689 = vmax.f32 %v687, %v688
  %v690 = vrot.slane %v689, 1
  %v691 = vmax.f32 %v689, %v690
  %v692 = vsel %vm264, %v69, -inf
  %v693 = vrot.slane %v692, 4
  %v694 = vmax.f32 %v692, %v693
  %v695 = vrot.slane %v694, 2
  %v696 = vmax.f32 %v694, %v695
  %v697 = vrot.slane %v696, 1
  %v698 = vmax.f32 %v696, %v697
  %v699 = vsel %vm264, %v70, -inf
  %v700 = vrot.slane %v699, 4
  %v701 = vmax.f32 %v699, %v700
  %v702 = vrot.slane %v701, 2
  %v703 = vmax.f32 %v701, %v702
  %v704 = vrot.slane %v703, 1
  %v705 = vmax.f32 %v703, %v704
  %v706 = vsel %vm264, %v71, -inf
  %v707 = vrot.slane %v706, 4
  %v708 = vmax.f32 %v706, %v707
  %v709 = vrot.slane %v708, 2
  %v710 = vmax.f32 %v708, %v709
  %v711 = vrot.slane %v710, 1
  %v712 = vmax.f32 %v710, %v711
  %v713 = vsel %vm264, %v72, -inf
  %v714 = vrot.slane %v713, 4
  %v715 = vmax.f32 %v713, %v714
  %v716 = vrot.slane %v715, 2
  %v717 = vmax.f32 %v715, %v716
  %v718 = vrot.slane %v717, 1
  %v719 = vmax.f32 %v717, %v718
  %v720 = vsel %vm264, %v73, -inf
  %v721 = vrot.slane %v720, 4
  %v722 = vmax.f32 %v720, %v721
  %v723 = vrot.slane %v722, 2
  %v724 = vmax.f32 %v722, %v723
  %v725 = vrot.slane %v724, 1
  %v726 = vmax.f32 %v724, %v725
  %v727 = vsel %vm264, %v74, -inf
  %v728 = vrot.slane %v727, 4
  %v729 = vmax.f32 %v727, %v728
  %v730 = vrot.slane %v729, 2
  %v731 = vmax.f32 %v729, %v730
  %v732 = vrot.slane %v731, 1
  %v733 = vmax.f32 %v731, %v732
  %v734 = vsel %vm264, %v75, -inf
  %v735 = vrot.slane %v734, 4
  %v736 = vmax.f32 %v734, %v735
  %v737 = vrot.slane %v736, 2
  %v738 = vmax.f32 %v736, %v737
  %v739 = vrot.slane %v738, 1
  %v740 = vmax.f32 %v738, %v739
  %v741 = vsel %vm264, %v76, -inf
  %v742 = vrot.slane %v741, 4
  %v743 = vmax.f32 %v741, %v742
  %v744 = vrot.slane %v743, 2
  %v745 = vmax.f32 %v743, %v744
  %v746 = vrot.slane %v745, 1
  %v747 = vmax.f32 %v745, %v746
  %v748 = vsel %vm264, %v77, -inf
  %v749 = vrot.slane %v748, 4
  %v750 = vmax.f32 %v748, %v749
  %v751 = vrot.slane %v750, 2
  %v752 = vmax.f32 %v750, %v751
  %v753 = vrot.slane %v752, 1
  %v754 = vmax.f32 %v752, %v753
  %v755 = vsel %vm264, %v78, -inf
  %v756 = vrot.slane %v755, 4
  %v757 = vmax.f32 %v755, %v756
  %v758 = vrot.slane %v757, 2
  %v759 = vmax.f32 %v757, %v758
  %v760 = vrot.slane %v759, 1
  %v761 = vmax.f32 %v759, %v760
  %v762 = vsel %vm264, %v79, -inf
  %v763 = vrot.slane %v762, 4
  %v764 = vmax.f32 %v762, %v763
  %v765 = vrot.slane %v764, 2
  %v766 = vmax.f32 %v764, %v765
  %v767 = vrot.slane %v766, 1
  %v768 = vmax.f32 %v766, %v767
  %v769 = vsel %vm264, %v80, -inf
  %v770 = vrot.slane %v769, 4
  %v771 = vmax.f32 %v769, %v770
  %v772 = vrot.slane %v771, 2
  %v773 = vmax.f32 %v771, %v772
  %v774 = vrot.slane %v773, 1
  %v775 = vmax.f32 %v773, %v774
  %v776 = vsel %vm264, %v81, -inf
  %v777 = vrot.slane %v776, 4
  %v778 = vmax.f32 %v776, %v777
  %v779 = vrot.slane %v778, 2
  %v780 = vmax.f32 %v778, %v779
  %v781 = vrot.slane %v780, 1
  %v782 = vmax.f32 %v780, %v781
  %v783 = vsel %vm264, %v82, -inf
  %v784 = vrot.slane %v783, 4
  %v785 = vmax.f32 %v783, %v784
  %v786 = vrot.slane %v785, 2
  %v787 = vmax.f32 %v785, %v786
  %v788 = vrot.slane %v787, 1
  %v789 = vmax.f32 %v787, %v788
  %v790 = vsel %vm264, %v83, -inf
  %v791 = vrot.slane %v790, 4
  %v792 = vmax.f32 %v790, %v791
  %v793 = vrot.slane %v792, 2
  %v794 = vmax.f32 %v792, %v793
  %v795 = vrot.slane %v794, 1
  %v796 = vmax.f32 %v794, %v795
  %v797 = vsel %vm264, %v84, -inf
  %v798 = vrot.slane %v797, 4
  %v799 = vmax.f32 %v797, %v798
  %v800 = vrot.slane %v799, 2
  %v801 = vmax.f32 %v799, %v800
  %v802 = vrot.slane %v801, 1
  %v803 = vmax.f32 %v801, %v802
  %v804 = vsel %vm264, %v85, -inf
  %v805 = vrot.slane %v804, 4
  %v806 = vmax.f32 %v804, %v805
  %v807 = vrot.slane %v806, 2
  %v808 = vmax.f32 %v806, %v807
  %v809 = vrot.slane %v808, 1
  %v810 = vmax.f32 %v808, %v809
  %v811 = vsel %vm264, %v86, -inf
  %v812 = vrot.slane %v811, 4
  %v813 = vmax.f32 %v811, %v812
  %v814 = vrot.slane %v813, 2
  %v815 = vmax.f32 %v813, %v814
  %v816 = vrot.slane %v815, 1
  %v817 = vmax.f32 %v815, %v816
  %v818 = vsel %vm264, %v87, -inf
  %v819 = vrot.slane %v818, 4
  %v820 = vmax.f32 %v818, %v819
  %v821 = vrot.slane %v820, 2
  %v822 = vmax.f32 %v820, %v821
  %v823 = vrot.slane %v822, 1
  %v824 = vmax.f32 %v822, %v823
  %v825 = vsel %vm264, %v88, -inf
  %v826 = vrot.slane %v825, 4
  %v827 = vmax.f32 %v825, %v826
  %v828 = vrot.slane %v827, 2
  %v829 = vmax.f32 %v827, %v828
  %v830 = vrot.slane %v829, 1
  %v831 = vmax.f32 %v829, %v830
  %v832 = vsel %vm264, %v89, -inf
  %v833 = vrot.slane %v832, 4
  %v834 = vmax.f32 %v832, %v833
  %v835 = vrot.slane %v834, 2
  %v836 = vmax.f32 %v834, %v835
  %v837 = vrot.slane %v836, 1
  %v838 = vmax.f32 %v836, %v837
  %v839 = vsel %vm264, %v90, -inf
  %v840 = vrot.slane %v839, 4
  %v841 = vmax.f32 %v839, %v840
  %v842 = vrot.slane %v841, 2
  %v843 = vmax.f32 %v841, %v842
  %v844 = vrot.slane %v843, 1
  %v845 = vmax.f32 %v843, %v844
  %v846 = vsel %vm264, %v91, -inf
  %v847 = vrot.slane %v846, 4
  %v848 = vmax.f32 %v846, %v847
  %v849 = vrot.slane %v848, 2
  %v850 = vmax.f32 %v848, %v849
  %v851 = vrot.slane %v850, 1
  %v852 = vmax.f32 %v850, %v851
  %v853 = vsel %vm264, %v92, -inf
  %v854 = vrot.slane %v853, 4
  %v855 = vmax.f32 %v853, %v854
  %v856 = vrot.slane %v855, 2
  %v857 = vmax.f32 %v855, %v856
  %v858 = vrot.slane %v857, 1
  %v859 = vmax.f32 %v857, %v858
  %v860 = vsel %vm264, %v93, -inf
  %v861 = vrot.slane %v860, 4
  %v862 = vmax.f32 %v860, %v861
  %v863 = vrot.slane %v862, 2
  %v864 = vmax.f32 %v862, %v863
  %v865 = vrot.slane %v864, 1
  %v866 = vmax.f32 %v864, %v865
  %v867 = vsel %vm264, %v94, -inf
  %v868 = vrot.slane %v867, 4
  %v869 = vmax.f32 %v867, %v868
  %v870 = vrot.slane %v869, 2
  %v871 = vmax.f32 %v869, %v870
  %v872 = vrot.slane %v871, 1
  %v873 = vmax.f32 %v871, %v872
  %v874 = vsel %vm264, %v95, -inf
  %v875 = vrot.slane %v874, 4
  %v876 = vmax.f32 %v874, %v875
  %v877 = vrot.slane %v876, 2
  %v878 = vmax.f32 %v876, %v877
  %v879 = vrot.slane %v878, 1
  %v880 = vmax.f32 %v878, %v879
  %v881 = vsel %vm264, %v96, -inf
  %v882 = vrot.slane %v881, 4
  %v883 = vmax.f32 %v881, %v882
  %v884 = vrot.slane %v883, 2
  %v885 = vmax.f32 %v883, %v884
  %v886 = vrot.slane %v885, 1
  %v887 = vmax.f32 %v885, %v886
  %v888 = vsel %vm264, %v97, -inf
  %v889 = vrot.slane %v888, 4
  %v890 = vmax.f32 %v888, %v889
  %v891 = vrot.slane %v890, 2
  %v892 = vmax.f32 %v890, %v891
  %v893 = vrot.slane %v892, 1
  %v894 = vmax.f32 %v892, %v893
  %v895 = vsel %vm264, %v98, -inf
  %v896 = vrot.slane %v895, 4
  %v897 = vmax.f32 %v895, %v896
  %v898 = vrot.slane %v897, 2
  %v899 = vmax.f32 %v897, %v898
  %v900 = vrot.slane %v899, 1
  %v901 = vmax.f32 %v899, %v900
  %v902 = vsel %vm264, %v99, -inf
  %v903 = vrot.slane %v902, 4
  %v904 = vmax.f32 %v902, %v903
  %v905 = vrot.slane %v904, 2
  %v906 = vmax.f32 %v904, %v905
  %v907 = vrot.slane %v906, 1
  %v908 = vmax.f32 %v906, %v907
  %v909 = vsel %vm264, %v100, -inf
  %v910 = vrot.slane %v909, 4
  %v911 = vmax.f32 %v909, %v910
  %v912 = vrot.slane %v911, 2
  %v913 = vmax.f32 %v911, %v912
  %v914 = vrot.slane %v913, 1
  %v915 = vmax.f32 %v913, %v914
  %v916 = vsel %vm264, %v101, -inf
  %v917 = vrot.slane %v916, 4
  %v918 = vmax.f32 %v916, %v917
  %v919 = vrot.slane %v918, 2
  %v920 = vmax.f32 %v918, %v919
  %v921 = vrot.slane %v920, 1
  %v922 = vmax.f32 %v920, %v921
  %v923 = vsel %vm264, %v102, -inf
  %v924 = vrot.slane %v923, 4
  %v925 = vmax.f32 %v923, %v924
  %v926 = vrot.slane %v925, 2
  %v927 = vmax.f32 %v925, %v926
  %v928 = vrot.slane %v927, 1
  %v929 = vmax.f32 %v927, %v928
  %v930 = vsel %vm264, %v103, -inf
  %v931 = vrot.slane %v930, 4
  %v932 = vmax.f32 %v930, %v931
  %v933 = vrot.slane %v932, 2
  %v934 = vmax.f32 %v932, %v933
  %v935 = vrot.slane %v934, 1
  %v936 = vmax.f32 %v934, %v935
  %v937 = vsel %vm264, %v104, -inf
  %v938 = vrot.slane %v937, 4
  %v939 = vmax.f32 %v937, %v938
  %v940 = vrot.slane %v939, 2
  %v941 = vmax.f32 %v939, %v940
  %v942 = vrot.slane %v941, 1
  %v943 = vmax.f32 %v941, %v942
  %v944 = vsel %vm264, %v105, -inf
  %v945 = vrot.slane %v944, 4
  %v946 = vmax.f32 %v944, %v945
  %v947 = vrot.slane %v946, 2
  %v948 = vmax.f32 %v946, %v947
  %v949 = vrot.slane %v948, 1
  %v950 = vmax.f32 %v948, %v949
  %v951 = vsel %vm264, %v106, -inf
  %v952 = vrot.slane %v951, 4
  %v953 = vmax.f32 %v951, %v952
  %v954 = vrot.slane %v953, 2
  %v955 = vmax.f32 %v953, %v954
  %v956 = vrot.slane %v955, 1
  %v957 = vmax.f32 %v955, %v956
  %v958 = vsel %vm264, %v107, -inf
  %v959 = vrot.slane %v958, 4
  %v960 = vmax.f32 %v958, %v959
  %v961 = vrot.slane %v960, 2
  %v962 = vmax.f32 %v960, %v961
  %v963 = vrot.slane %v962, 1
  %v964 = vmax.f32 %v962, %v963
  %v965 = vsel %vm264, %v108, -inf
  %v966 = vrot.slane %v965, 4
  %v967 = vmax.f32 %v965, %v966
  %v968 = vrot.slane %v967, 2
  %v969 = vmax.f32 %v967, %v968
  %v970 = vrot.slane %v969, 1
  %v971 = vmax.f32 %v969, %v970
  %v972 = vsel %vm264, %v109, -inf
  %v973 = vrot.slane %v972, 4
  %v974 = vmax.f32 %v972, %v973
  %v975 = vrot.slane %v974, 2
  %v976 = vmax.f32 %v974, %v975
  %v977 = vrot.slane %v976, 1
  %v978 = vmax.f32 %v976, %v977
  %v979 = vsel %vm264, %v110, -inf
  %v980 = vrot.slane %v979, 4
  %v981 = vmax.f32 %v979, %v980
  %v982 = vrot.slane %v981, 2
  %v983 = vmax.f32 %v981, %v982
  %v984 = vrot.slane %v983, 1
  %v985 = vmax.f32 %v983, %v984
  %v986 = vsel %vm264, %v111, -inf
  %v987 = vrot.slane %v986, 4
  %v988 = vmax.f32 %v986, %v987
  %v989 = vrot.slane %v988, 2
  %v990 = vmax.f32 %v988, %v989
  %v991 = vrot.slane %v990, 1
  %v992 = vmax.f32 %v990, %v991
  %v993 = vsel %vm264, %v112, -inf
  %v994 = vrot.slane %v993, 4
  %v995 = vmax.f32 %v993, %v994
  %v996 = vrot.slane %v995, 2
  %v997 = vmax.f32 %v995, %v996
  %v998 = vrot.slane %v997, 1
  %v999 = vmax.f32 %v997, %v998
  %v1000 = vsel %vm264, %v113, -inf
  %v1001 = vrot.slane %v1000, 4
  %v1002 = vmax.f32 %v1000, %v1001
  %v1003 = vrot.slane %v1002, 2
  %v1004 = vmax.f32 %v1002, %v1003
  %v1005 = vrot.slane %v1004, 1
  %v1006 = vmax.f32 %v1004, %v1005
  %v1007 = vsel %vm264, %v114, -inf
  %v1008 = vrot.slane %v1007, 4
  %v1009 = vmax.f32 %v1007, %v1008
  %v1010 = vrot.slane %v1009, 2
  %v1011 = vmax.f32 %v1009, %v1010
  %v1012 = vrot.slane %v1011, 1
  %v1013 = vmax.f32 %v1011, %v1012
  %v1014 = vsel %vm264, %v115, -inf
  %v1015 = vrot.slane %v1014, 4
  %v1016 = vmax.f32 %v1014, %v1015
  %v1017 = vrot.slane %v1016, 2
  %v1018 = vmax.f32 %v1016, %v1017
  %v1019 = vrot.slane %v1018, 1
  %v1020 = vmax.f32 %v1018, %v1019
  %v1021 = vsel %vm264, %v116, -inf
  %v1022 = vrot.slane %v1021, 4
  %v1023 = vmax.f32 %v1021, %v1022
  %v1024 = vrot.slane %v1023, 2
  %v1025 = vmax.f32 %v1023, %v1024
  %v1026 = vrot.slane %v1025, 1
  %v1027 = vmax.f32 %v1025, %v1026
  %v1028 = vsel %vm264, %v117, -inf
  %v1029 = vrot.slane %v1028, 4
  %v1030 = vmax.f32 %v1028, %v1029
  %v1031 = vrot.slane %v1030, 2
  %v1032 = vmax.f32 %v1030, %v1031
  %v1033 = vrot.slane %v1032, 1
  %v1034 = vmax.f32 %v1032, %v1033
  %v1035 = vsel %vm264, %v118, -inf
  %v1036 = vrot.slane %v1035, 4
  %v1037 = vmax.f32 %v1035, %v1036
  %v1038 = vrot.slane %v1037, 2
  %v1039 = vmax.f32 %v1037, %v1038
  %v1040 = vrot.slane %v1039, 1
  %v1041 = vmax.f32 %v1039, %v1040
  %v1042 = vsel %vm264, %v119, -inf
  %v1043 = vrot.slane %v1042, 4
  %v1044 = vmax.f32 %v1042, %v1043
  %v1045 = vrot.slane %v1044, 2
  %v1046 = vmax.f32 %v1044, %v1045
  %v1047 = vrot.slane %v1046, 1
  %v1048 = vmax.f32 %v1046, %v1047
  %v1049 = vsel %vm264, %v120, -inf
  %v1050 = vrot.slane %v1049, 4
  %v1051 = vmax.f32 %v1049, %v1050
  %v1052 = vrot.slane %v1051, 2
  %v1053 = vmax.f32 %v1051, %v1052
  %v1054 = vrot.slane %v1053, 1
  %v1055 = vmax.f32 %v1053, %v1054
  %v1056 = vsel %vm264, %v121, -inf
  %v1057 = vrot.slane %v1056, 4
  %v1058 = vmax.f32 %v1056, %v1057
  %v1059 = vrot.slane %v1058, 2
  %v1060 = vmax.f32 %v1058, %v1059
  %v1061 = vrot.slane %v1060, 1
  %v1062 = vmax.f32 %v1060, %v1061
  %v1063 = vsel %vm264, %v122, -inf
  %v1064 = vrot.slane %v1063, 4
  %v1065 = vmax.f32 %v1063, %v1064
  %v1066 = vrot.slane %v1065, 2
  %v1067 = vmax.f32 %v1065, %v1066
  %v1068 = vrot.slane %v1067, 1
  %v1069 = vmax.f32 %v1067, %v1068
  %v1070 = vsel %vm264, %v123, -inf
  %v1071 = vrot.slane %v1070, 4
  %v1072 = vmax.f32 %v1070, %v1071
  %v1073 = vrot.slane %v1072, 2
  %v1074 = vmax.f32 %v1072, %v1073
  %v1075 = vrot.slane %v1074, 1
  %v1076 = vmax.f32 %v1074, %v1075
  %v1077 = vsel %vm264, %v124, -inf
  %v1078 = vrot.slane %v1077, 4
  %v1079 = vmax.f32 %v1077, %v1078
  %v1080 = vrot.slane %v1079, 2
  %v1081 = vmax.f32 %v1079, %v1080
  %v1082 = vrot.slane %v1081, 1
  %v1083 = vmax.f32 %v1081, %v1082
  %v1084 = vsel %vm264, %v125, -inf
  %v1085 = vrot.slane %v1084, 4
  %v1086 = vmax.f32 %v1084, %v1085
  %v1087 = vrot.slane %v1086, 2
  %v1088 = vmax.f32 %v1086, %v1087
  %v1089 = vrot.slane %v1088, 1
  %v1090 = vmax.f32 %v1088, %v1089
  %v1091 = vsel %vm264, %v126, -inf
  %v1092 = vrot.slane %v1091, 4
  %v1093 = vmax.f32 %v1091, %v1092
  %v1094 = vrot.slane %v1093, 2
  %v1095 = vmax.f32 %v1093, %v1094
  %v1096 = vrot.slane %v1095, 1
  %v1097 = vmax.f32 %v1095, %v1096
  %v1098 = vsel %vm264, %v127, -inf
  %v1099 = vrot.slane %v1098, 4
  %v1100 = vmax.f32 %v1098, %v1099
  %v1101 = vrot.slane %v1100, 2
  %v1102 = vmax.f32 %v1100, %v1101
  %v1103 = vrot.slane %v1102, 1
  %v1104 = vmax.f32 %v1102, %v1103
  %v1105 = vsel %vm264, %v128, -inf
  %v1106 = vrot.slane %v1105, 4
  %v1107 = vmax.f32 %v1105, %v1106
  %v1108 = vrot.slane %v1107, 2
  %v1109 = vmax.f32 %v1107, %v1108
  %v1110 = vrot.slane %v1109, 1
  %v1111 = vmax.f32 %v1109, %v1110
  %v1112 = vsel %vm264, %v129, -inf
  %v1113 = vrot.slane %v1112, 4
  %v1114 = vmax.f32 %v1112, %v1113
  %v1115 = vrot.slane %v1114, 2
  %v1116 = vmax.f32 %v1114, %v1115
  %v1117 = vrot.slane %v1116, 1
  %v1118 = vmax.f32 %v1116, %v1117
  %v1119 = vsel %vm264, %v130, -inf
  %v1120 = vrot.slane %v1119, 4
  %v1121 = vmax.f32 %v1119, %v1120
  %v1122 = vrot.slane %v1121, 2
  %v1123 = vmax.f32 %v1121, %v1122
  %v1124 = vrot.slane %v1123, 1
  %v1125 = vmax.f32 %v1123, %v1124
  %v1126 = vsel %vm264, %v131, -inf
  %v1127 = vrot.slane %v1126, 4
  %v1128 = vmax.f32 %v1126, %v1127
  %v1129 = vrot.slane %v1128, 2
  %v1130 = vmax.f32 %v1128, %v1129
  %v1131 = vrot.slane %v1130, 1
  %v1132 = vmax.f32 %v1130, %v1131
  %v1133 = vsel %vm264, %v132, -inf
  %v1134 = vrot.slane %v1133, 4
  %v1135 = vmax.f32 %v1133, %v1134
  %v1136 = vrot.slane %v1135, 2
  %v1137 = vmax.f32 %v1135, %v1136
  %v1138 = vrot.slane %v1137, 1
  %v1139 = vmax.f32 %v1137, %v1138
  %v1140 = vsel %vm264, %v133, -inf
  %v1141 = vrot.slane %v1140, 4
  %v1142 = vmax.f32 %v1140, %v1141
  %v1143 = vrot.slane %v1142, 2
  %v1144 = vmax.f32 %v1142, %v1143
  %v1145 = vrot.slane %v1144, 1
  %v1146 = vmax.f32 %v1144, %v1145
  %v1147 = vsel %vm264, %v134, -inf
  %v1148 = vrot.slane %v1147, 4
  %v1149 = vmax.f32 %v1147, %v1148
  %v1150 = vrot.slane %v1149, 2
  %v1151 = vmax.f32 %v1149, %v1150
  %v1152 = vrot.slane %v1151, 1
  %v1153 = vmax.f32 %v1151, %v1152
  %v1154 = vsel %vm264, %v135, -inf
  %v1155 = vrot.slane %v1154, 4
  %v1156 = vmax.f32 %v1154, %v1155
  %v1157 = vrot.slane %v1156, 2
  %v1158 = vmax.f32 %v1156, %v1157
  %v1159 = vrot.slane %v1158, 1
  %v1160 = vmax.f32 %v1158, %v1159
  %v1161 = vsel %vm264, %v136, -inf
  %v1162 = vrot.slane %v1161, 4
  %v1163 = vmax.f32 %v1161, %v1162
  %v1164 = vrot.slane %v1163, 2
  %v1165 = vmax.f32 %v1163, %v1164
  %v1166 = vrot.slane %v1165, 1
  %v1167 = vmax.f32 %v1165, %v1166
  %v1168 = vsel %vm264, %v137, -inf
  %v1169 = vrot.slane %v1168, 4
  %v1170 = vmax.f32 %v1168, %v1169
  %v1171 = vrot.slane %v1170, 2
  %v1172 = vmax.f32 %v1170, %v1171
  %v1173 = vrot.slane %v1172, 1
  %v1174 = vmax.f32 %v1172, %v1173
  %v1175 = vsel %vm264, %v138, -inf
  %v1176 = vrot.slane %v1175, 4
  %v1177 = vmax.f32 %v1175, %v1176
  %v1178 = vrot.slane %v1177, 2
  %v1179 = vmax.f32 %v1177, %v1178
  %v1180 = vrot.slane %v1179, 1
  %v1181 = vmax.f32 %v1179, %v1180
  %v1182 = vsel %vm264, %v139, -inf
  %v1183 = vrot.slane %v1182, 4
  %v1184 = vmax.f32 %v1182, %v1183
  %v1185 = vrot.slane %v1184, 2
  %v1186 = vmax.f32 %v1184, %v1185
  %v1187 = vrot.slane %v1186, 1
  %v1188 = vmax.f32 %v1186, %v1187
  %v1189 = vsel %vm264, %v140, -inf
  %v1190 = vrot.slane %v1189, 4
  %v1191 = vmax.f32 %v1189, %v1190
  %v1192 = vrot.slane %v1191, 2
  %v1193 = vmax.f32 %v1191, %v1192
  %v1194 = vrot.slane %v1193, 1
  %v1195 = vmax.f32 %v1193, %v1194
  %v1196 = vsel %vm264, %v141, -inf
  %v1197 = vrot.slane %v1196, 4
  %v1198 = vmax.f32 %v1196, %v1197
  %v1199 = vrot.slane %v1198, 2
  %v1200 = vmax.f32 %v1198, %v1199
  %v1201 = vrot.slane %v1200, 1
  %v1202 = vmax.f32 %v1200, %v1201
  %v1203 = vsel %vm264, %v142, -inf
  %v1204 = vrot.slane %v1203, 4
  %v1205 = vmax.f32 %v1203, %v1204
  %v1206 = vrot.slane %v1205, 2
  %v1207 = vmax.f32 %v1205, %v1206
  %v1208 = vrot.slane %v1207, 1
  %v1209 = vmax.f32 %v1207, %v1208
  %v1210 = vsel %vm264, %v143, -inf
  %v1211 = vrot.slane %v1210, 4
  %v1212 = vmax.f32 %v1210, %v1211
  %v1213 = vrot.slane %v1212, 2
  %v1214 = vmax.f32 %v1212, %v1213
  %v1215 = vrot.slane %v1214, 1
  %v1216 = vmax.f32 %v1214, %v1215
  %v1217 = vsel %vm264, %v144, -inf
  %v1218 = vrot.slane %v1217, 4
  %v1219 = vmax.f32 %v1217, %v1218
  %v1220 = vrot.slane %v1219, 2
  %v1221 = vmax.f32 %v1219, %v1220
  %v1222 = vrot.slane %v1221, 1
  %v1223 = vmax.f32 %v1221, %v1222
  %v1224 = vsel %vm264, %v145, -inf
  %v1225 = vrot.slane %v1224, 4
  %v1226 = vmax.f32 %v1224, %v1225
  %v1227 = vrot.slane %v1226, 2
  %v1228 = vmax.f32 %v1226, %v1227
  %v1229 = vrot.slane %v1228, 1
  %v1230 = vmax.f32 %v1228, %v1229
  %v1231 = vsel %vm264, %v146, -inf
  %v1232 = vrot.slane %v1231, 4
  %v1233 = vmax.f32 %v1231, %v1232
  %v1234 = vrot.slane %v1233, 2
  %v1235 = vmax.f32 %v1233, %v1234
  %v1236 = vrot.slane %v1235, 1
  %v1237 = vmax.f32 %v1235, %v1236
  %v1238 = vsel %vm264, %v147, -inf
  %v1239 = vrot.slane %v1238, 4
  %v1240 = vmax.f32 %v1238, %v1239
  %v1241 = vrot.slane %v1240, 2
  %v1242 = vmax.f32 %v1240, %v1241
  %v1243 = vrot.slane %v1242, 1
  %v1244 = vmax.f32 %v1242, %v1243
  %v1245 = vsel %vm264, %v148, -inf
  %v1246 = vrot.slane %v1245, 4
  %v1247 = vmax.f32 %v1245, %v1246
  %v1248 = vrot.slane %v1247, 2
  %v1249 = vmax.f32 %v1247, %v1248
  %v1250 = vrot.slane %v1249, 1
  %v1251 = vmax.f32 %v1249, %v1250
  %v1252 = vsel %vm264, %v149, -inf
  %v1253 = vrot.slane %v1252, 4
  %v1254 = vmax.f32 %v1252, %v1253
  %v1255 = vrot.slane %v1254, 2
  %v1256 = vmax.f32 %v1254, %v1255
  %v1257 = vrot.slane %v1256, 1
  %v1258 = vmax.f32 %v1256, %v1257
  %v1259 = vsel %vm264, %v150, -inf
  %v1260 = vrot.slane %v1259, 4
  %v1261 = vmax.f32 %v1259, %v1260
  %v1262 = vrot.slane %v1261, 2
  %v1263 = vmax.f32 %v1261, %v1262
  %v1264 = vrot.slane %v1263, 1
  %v1265 = vmax.f32 %v1263, %v1264
  %v1266 = vsel %vm264, %v151, -inf
  %v1267 = vrot.slane %v1266, 4
  %v1268 = vmax.f32 %v1266, %v1267
  %v1269 = vrot.slane %v1268, 2
  %v1270 = vmax.f32 %v1268, %v1269
  %v1271 = vrot.slane %v1270, 1
  %v1272 = vmax.f32 %v1270, %v1271
  %v1273 = vsel %vm264, %v152, -inf
  %v1274 = vrot.slane %v1273, 4
  %v1275 = vmax.f32 %v1273, %v1274
  %v1276 = vrot.slane %v1275, 2
  %v1277 = vmax.f32 %v1275, %v1276
  %v1278 = vrot.slane %v1277, 1
  %v1279 = vmax.f32 %v1277, %v1278
  %v1280 = vsel %vm264, %v153, -inf
  %v1281 = vrot.slane %v1280, 4
  %v1282 = vmax.f32 %v1280, %v1281
  %v1283 = vrot.slane %v1282, 2
  %v1284 = vmax.f32 %v1282, %v1283
  %v1285 = vrot.slane %v1284, 1
  %v1286 = vmax.f32 %v1284, %v1285
  %v1287 = vsel %vm264, %v154, -inf
  %v1288 = vrot.slane %v1287, 4
  %v1289 = vmax.f32 %v1287, %v1288
  %v1290 = vrot.slane %v1289, 2
  %v1291 = vmax.f32 %v1289, %v1290
  %v1292 = vrot.slane %v1291, 1
  %v1293 = vmax.f32 %v1291, %v1292
  %v1294 = vsel %vm264, %v155, -inf
  %v1295 = vrot.slane %v1294, 4
  %v1296 = vmax.f32 %v1294, %v1295
  %v1297 = vrot.slane %v1296, 2
  %v1298 = vmax.f32 %v1296, %v1297
  %v1299 = vrot.slane %v1298, 1
  %v1300 = vmax.f32 %v1298, %v1299
  %v1301 = vsel %vm264, %v156, -inf
  %v1302 = vrot.slane %v1301, 4
  %v1303 = vmax.f32 %v1301, %v1302
  %v1304 = vrot.slane %v1303, 2
  %v1305 = vmax.f32 %v1303, %v1304
  %v1306 = vrot.slane %v1305, 1
  %v1307 = vmax.f32 %v1305, %v1306
  %v1308 = vsel %vm264, %v157, -inf
  %v1309 = vrot.slane %v1308, 4
  %v1310 = vmax.f32 %v1308, %v1309
  %v1311 = vrot.slane %v1310, 2
  %v1312 = vmax.f32 %v1310, %v1311
  %v1313 = vrot.slane %v1312, 1
  %v1314 = vmax.f32 %v1312, %v1313
  %v1315 = vsel %vm264, %v158, -inf
  %v1316 = vrot.slane %v1315, 4
  %v1317 = vmax.f32 %v1315, %v1316
  %v1318 = vrot.slane %v1317, 2
  %v1319 = vmax.f32 %v1317, %v1318
  %v1320 = vrot.slane %v1319, 1
  %v1321 = vmax.f32 %v1319, %v1320
  %v1322 = vsel %vm264, %v159, -inf
  %v1323 = vrot.slane %v1322, 4
  %v1324 = vmax.f32 %v1322, %v1323
  %v1325 = vrot.slane %v1324, 2
  %v1326 = vmax.f32 %v1324, %v1325
  %v1327 = vrot.slane %v1326, 1
  %v1328 = vmax.f32 %v1326, %v1327
  %v1329 = vsel %vm264, %v160, -inf
  %v1330 = vrot.slane %v1329, 4
  %v1331 = vmax.f32 %v1329, %v1330
  %v1332 = vrot.slane %v1331, 2
  %v1333 = vmax.f32 %v1331, %v1332
  %v1334 = vrot.slane %v1333, 1
  %v1335 = vmax.f32 %v1333, %v1334
  %v1336 = vsel %vm264, %v161, -inf
  %v1337 = vrot.slane %v1336, 4
  %v1338 = vmax.f32 %v1336, %v1337
  %v1339 = vrot.slane %v1338, 2
  %v1340 = vmax.f32 %v1338, %v1339
  %v1341 = vrot.slane %v1340, 1
  %v1342 = vmax.f32 %v1340, %v1341
  %v1343 = vsel %vm264, %v162, -inf
  %v1344 = vrot.slane %v1343, 4
  %v1345 = vmax.f32 %v1343, %v1344
  %v1346 = vrot.slane %v1345, 2
  %v1347 = vmax.f32 %v1345, %v1346
  %v1348 = vrot.slane %v1347, 1
  %v1349 = vmax.f32 %v1347, %v1348
  %v1350 = vsel %vm264, %v163, -inf
  %v1351 = vrot.slane %v1350, 4
  %v1352 = vmax.f32 %v1350, %v1351
  %v1353 = vrot.slane %v1352, 2
  %v1354 = vmax.f32 %v1352, %v1353
  %v1355 = vrot.slane %v1354, 1
  %v1356 = vmax.f32 %v1354, %v1355
  %v1357 = vsel %vm264, %v164, -inf
  %v1358 = vrot.slane %v1357, 4
  %v1359 = vmax.f32 %v1357, %v1358
  %v1360 = vrot.slane %v1359, 2
  %v1361 = vmax.f32 %v1359, %v1360
  %v1362 = vrot.slane %v1361, 1
  %v1363 = vmax.f32 %v1361, %v1362
  %v1364 = vsel %vm264, %v165, -inf
  %v1365 = vrot.slane %v1364, 4
  %v1366 = vmax.f32 %v1364, %v1365
  %v1367 = vrot.slane %v1366, 2
  %v1368 = vmax.f32 %v1366, %v1367
  %v1369 = vrot.slane %v1368, 1
  %v1370 = vmax.f32 %v1368, %v1369
  %v1371 = vsel %vm264, %v166, -inf
  %v1372 = vrot.slane %v1371, 4
  %v1373 = vmax.f32 %v1371, %v1372
  %v1374 = vrot.slane %v1373, 2
  %v1375 = vmax.f32 %v1373, %v1374
  %v1376 = vrot.slane %v1375, 1
  %v1377 = vmax.f32 %v1375, %v1376
  %v1378 = vsel %vm264, %v167, -inf
  %v1379 = vrot.slane %v1378, 4
  %v1380 = vmax.f32 %v1378, %v1379
  %v1381 = vrot.slane %v1380, 2
  %v1382 = vmax.f32 %v1380, %v1381
  %v1383 = vrot.slane %v1382, 1
  %v1384 = vmax.f32 %v1382, %v1383
  %v1385 = vsel %vm264, %v168, -inf
  %v1386 = vrot.slane %v1385, 4
  %v1387 = vmax.f32 %v1385, %v1386
  %v1388 = vrot.slane %v1387, 2
  %v1389 = vmax.f32 %v1387, %v1388
  %v1390 = vrot.slane %v1389, 1
  %v1391 = vmax.f32 %v1389, %v1390
  %v1392 = vsel %vm264, %v169, -inf
  %v1393 = vrot.slane %v1392, 4
  %v1394 = vmax.f32 %v1392, %v1393
  %v1395 = vrot.slane %v1394, 2
  %v1396 = vmax.f32 %v1394, %v1395
  %v1397 = vrot.slane %v1396, 1
  %v1398 = vmax.f32 %v1396, %v1397
  %v1399 = vsel %vm264, %v170, -inf
  %v1400 = vrot.slane %v1399, 4
  %v1401 = vmax.f32 %v1399, %v1400
  %v1402 = vrot.slane %v1401, 2
  %v1403 = vmax.f32 %v1401, %v1402
  %v1404 = vrot.slane %v1403, 1
  %v1405 = vmax.f32 %v1403, %v1404
  %v1406 = vsel %vm264, %v171, -inf
  %v1407 = vrot.slane %v1406, 4
  %v1408 = vmax.f32 %v1406, %v1407
  %v1409 = vrot.slane %v1408, 2
  %v1410 = vmax.f32 %v1408, %v1409
  %v1411 = vrot.slane %v1410, 1
  %v1412 = vmax.f32 %v1410, %v1411
  %v1413 = vsel %vm264, %v172, -inf
  %v1414 = vrot.slane %v1413, 4
  %v1415 = vmax.f32 %v1413, %v1414
  %v1416 = vrot.slane %v1415, 2
  %v1417 = vmax.f32 %v1415, %v1416
  %v1418 = vrot.slane %v1417, 1
  %v1419 = vmax.f32 %v1417, %v1418
  %v1420 = vsel %vm264, %v173, -inf
  %v1421 = vrot.slane %v1420, 4
  %v1422 = vmax.f32 %v1420, %v1421
  %v1423 = vrot.slane %v1422, 2
  %v1424 = vmax.f32 %v1422, %v1423
  %v1425 = vrot.slane %v1424, 1
  %v1426 = vmax.f32 %v1424, %v1425
  %v1427 = vsel %vm264, %v174, -inf
  %v1428 = vrot.slane %v1427, 4
  %v1429 = vmax.f32 %v1427, %v1428
  %v1430 = vrot.slane %v1429, 2
  %v1431 = vmax.f32 %v1429, %v1430
  %v1432 = vrot.slane %v1431, 1
  %v1433 = vmax.f32 %v1431, %v1432
  %v1434 = vsel %vm264, %v175, -inf
  %v1435 = vrot.slane %v1434, 4
  %v1436 = vmax.f32 %v1434, %v1435
  %v1437 = vrot.slane %v1436, 2
  %v1438 = vmax.f32 %v1436, %v1437
  %v1439 = vrot.slane %v1438, 1
  %v1440 = vmax.f32 %v1438, %v1439
  %v1441 = vsel %vm264, %v176, -inf
  %v1442 = vrot.slane %v1441, 4
  %v1443 = vmax.f32 %v1441, %v1442
  %v1444 = vrot.slane %v1443, 2
  %v1445 = vmax.f32 %v1443, %v1444
  %v1446 = vrot.slane %v1445, 1
  %v1447 = vmax.f32 %v1445, %v1446
  %v1448 = vsel %vm264, %v177, -inf
  %v1449 = vrot.slane %v1448, 4
  %v1450 = vmax.f32 %v1448, %v1449
  %v1451 = vrot.slane %v1450, 2
  %v1452 = vmax.f32 %v1450, %v1451
  %v1453 = vrot.slane %v1452, 1
  %v1454 = vmax.f32 %v1452, %v1453
  %v1455 = vsel %vm264, %v178, -inf
  %v1456 = vrot.slane %v1455, 4
  %v1457 = vmax.f32 %v1455, %v1456
  %v1458 = vrot.slane %v1457, 2
  %v1459 = vmax.f32 %v1457, %v1458
  %v1460 = vrot.slane %v1459, 1
  %v1461 = vmax.f32 %v1459, %v1460
  %v1462 = vsel %vm264, %v179, -inf
  %v1463 = vrot.slane %v1462, 4
  %v1464 = vmax.f32 %v1462, %v1463
  %v1465 = vrot.slane %v1464, 2
  %v1466 = vmax.f32 %v1464, %v1465
  %v1467 = vrot.slane %v1466, 1
  %v1468 = vmax.f32 %v1466, %v1467
  %v1469 = vsel %vm264, %v180, -inf
  %v1470 = vrot.slane %v1469, 4
  %v1471 = vmax.f32 %v1469, %v1470
  %v1472 = vrot.slane %v1471, 2
  %v1473 = vmax.f32 %v1471, %v1472
  %v1474 = vrot.slane %v1473, 1
  %v1475 = vmax.f32 %v1473, %v1474
  %v1476 = vsel %vm264, %v181, -inf
  %v1477 = vrot.slane %v1476, 4
  %v1478 = vmax.f32 %v1476, %v1477
  %v1479 = vrot.slane %v1478, 2
  %v1480 = vmax.f32 %v1478, %v1479
  %v1481 = vrot.slane %v1480, 1
  %v1482 = vmax.f32 %v1480, %v1481
  %v1483 = vsel %vm264, %v182, -inf
  %v1484 = vrot.slane %v1483, 4
  %v1485 = vmax.f32 %v1483, %v1484
  %v1486 = vrot.slane %v1485, 2
  %v1487 = vmax.f32 %v1485, %v1486
  %v1488 = vrot.slane %v1487, 1
  %v1489 = vmax.f32 %v1487, %v1488
  %v1490 = vsel %vm264, %v183, -inf
  %v1491 = vrot.slane %v1490, 4
  %v1492 = vmax.f32 %v1490, %v1491
  %v1493 = vrot.slane %v1492, 2
  %v1494 = vmax.f32 %v1492, %v1493
  %v1495 = vrot.slane %v1494, 1
  %v1496 = vmax.f32 %v1494, %v1495
  %v1497 = vsel %vm264, %v184, -inf
  %v1498 = vrot.slane %v1497, 4
  %v1499 = vmax.f32 %v1497, %v1498
  %v1500 = vrot.slane %v1499, 2
  %v1501 = vmax.f32 %v1499, %v1500
  %v1502 = vrot.slane %v1501, 1
  %v1503 = vmax.f32 %v1501, %v1502
  %v1504 = vsel %vm264, %v185, -inf
  %v1505 = vrot.slane %v1504, 4
  %v1506 = vmax.f32 %v1504, %v1505
  %v1507 = vrot.slane %v1506, 2
  %v1508 = vmax.f32 %v1506, %v1507
  %v1509 = vrot.slane %v1508, 1
  %v1510 = vmax.f32 %v1508, %v1509
  %v1511 = vsel %vm264, %v186, -inf
  %v1512 = vrot.slane %v1511, 4
  %v1513 = vmax.f32 %v1511, %v1512
  %v1514 = vrot.slane %v1513, 2
  %v1515 = vmax.f32 %v1513, %v1514
  %v1516 = vrot.slane %v1515, 1
  %v1517 = vmax.f32 %v1515, %v1516
  %v1518 = vsel %vm264, %v187, -inf
  %v1519 = vrot.slane %v1518, 4
  %v1520 = vmax.f32 %v1518, %v1519
  %v1521 = vrot.slane %v1520, 2
  %v1522 = vmax.f32 %v1520, %v1521
  %v1523 = vrot.slane %v1522, 1
  %v1524 = vmax.f32 %v1522, %v1523
  %v1525 = vsel %vm264, %v188, -inf
  %v1526 = vrot.slane %v1525, 4
  %v1527 = vmax.f32 %v1525, %v1526
  %v1528 = vrot.slane %v1527, 2
  %v1529 = vmax.f32 %v1527, %v1528
  %v1530 = vrot.slane %v1529, 1
  %v1531 = vmax.f32 %v1529, %v1530
  %v1532 = vsel %vm264, %v189, -inf
  %v1533 = vrot.slane %v1532, 4
  %v1534 = vmax.f32 %v1532, %v1533
  %v1535 = vrot.slane %v1534, 2
  %v1536 = vmax.f32 %v1534, %v1535
  %v1537 = vrot.slane %v1536, 1
  %v1538 = vmax.f32 %v1536, %v1537
  %v1539 = vsel %vm264, %v190, -inf
  %v1540 = vrot.slane %v1539, 4
  %v1541 = vmax.f32 %v1539, %v1540
  %v1542 = vrot.slane %v1541, 2
  %v1543 = vmax.f32 %v1541, %v1542
  %v1544 = vrot.slane %v1543, 1
  %v1545 = vmax.f32 %v1543, %v1544
  %v1546 = vsel %vm264, %v191, -inf
  %v1547 = vrot.slane %v1546, 4
  %v1548 = vmax.f32 %v1546, %v1547
  %v1549 = vrot.slane %v1548, 2
  %v1550 = vmax.f32 %v1548, %v1549
  %v1551 = vrot.slane %v1550, 1
  %v1552 = vmax.f32 %v1550, %v1551
  %v1553 = vsel %vm264, %v192, -inf
  %v1554 = vrot.slane %v1553, 4
  %v1555 = vmax.f32 %v1553, %v1554
  %v1556 = vrot.slane %v1555, 2
  %v1557 = vmax.f32 %v1555, %v1556
  %v1558 = vrot.slane %v1557, 1
  %v1559 = vmax.f32 %v1557, %v1558
  %v1560 = vsel %vm264, %v193, -inf
  %v1561 = vrot.slane %v1560, 4
  %v1562 = vmax.f32 %v1560, %v1561
  %v1563 = vrot.slane %v1562, 2
  %v1564 = vmax.f32 %v1562, %v1563
  %v1565 = vrot.slane %v1564, 1
  %v1566 = vmax.f32 %v1564, %v1565
  %v1567 = vsel %vm264, %v194, -inf
  %v1568 = vrot.slane %v1567, 4
  %v1569 = vmax.f32 %v1567, %v1568
  %v1570 = vrot.slane %v1569, 2
  %v1571 = vmax.f32 %v1569, %v1570
  %v1572 = vrot.slane %v1571, 1
  %v1573 = vmax.f32 %v1571, %v1572
  %v1574 = vsel %vm264, %v195, -inf
  %v1575 = vrot.slane %v1574, 4
  %v1576 = vmax.f32 %v1574, %v1575
  %v1577 = vrot.slane %v1576, 2
  %v1578 = vmax.f32 %v1576, %v1577
  %v1579 = vrot.slane %v1578, 1
  %v1580 = vmax.f32 %v1578, %v1579
  %v1581 = vsel %vm264, %v196, -inf
  %v1582 = vrot.slane %v1581, 4
  %v1583 = vmax.f32 %v1581, %v1582
  %v1584 = vrot.slane %v1583, 2
  %v1585 = vmax.f32 %v1583, %v1584
  %v1586 = vrot.slane %v1585, 1
  %v1587 = vmax.f32 %v1585, %v1586
  %v1588 = vsel %vm264, %v197, -inf
  %v1589 = vrot.slane %v1588, 4
  %v1590 = vmax.f32 %v1588, %v1589
  %v1591 = vrot.slane %v1590, 2
  %v1592 = vmax.f32 %v1590, %v1591
  %v1593 = vrot.slane %v1592, 1
  %v1594 = vmax.f32 %v1592, %v1593
  %v1595 = vsel %vm264, %v198, -inf
  %v1596 = vrot.slane %v1595, 4
  %v1597 = vmax.f32 %v1595, %v1596
  %v1598 = vrot.slane %v1597, 2
  %v1599 = vmax.f32 %v1597, %v1598
  %v1600 = vrot.slane %v1599, 1
  %v1601 = vmax.f32 %v1599, %v1600
  %v1602 = vsel %vm264, %v199, -inf
  %v1603 = vrot.slane %v1602, 4
  %v1604 = vmax.f32 %v1602, %v1603
  %v1605 = vrot.slane %v1604, 2
  %v1606 = vmax.f32 %v1604, %v1605
  %v1607 = vrot.slane %v1606, 1
  %v1608 = vmax.f32 %v1606, %v1607
  %v1609 = vsel %vm264, %v200, -inf
  %v1610 = vrot.slane %v1609, 4
  %v1611 = vmax.f32 %v1609, %v1610
  %v1612 = vrot.slane %v1611, 2
  %v1613 = vmax.f32 %v1611, %v1612
  %v1614 = vrot.slane %v1613, 1
  %v1615 = vmax.f32 %v1613, %v1614
  %v1616 = vsel %vm264, %v201, -inf
  %v1617 = vrot.slane %v1616, 4
  %v1618 = vmax.f32 %v1616, %v1617
  %v1619 = vrot.slane %v1618, 2
  %v1620 = vmax.f32 %v1618, %v1619
  %v1621 = vrot.slane %v1620, 1
  %v1622 = vmax.f32 %v1620, %v1621
  %v1623 = vsel %vm264, %v202, -inf
  %v1624 = vrot.slane %v1623, 4
  %v1625 = vmax.f32 %v1623, %v1624
  %v1626 = vrot.slane %v1625, 2
  %v1627 = vmax.f32 %v1625, %v1626
  %v1628 = vrot.slane %v1627, 1
  %v1629 = vmax.f32 %v1627, %v1628
  %v1630 = vsel %vm264, %v203, -inf
  %v1631 = vrot.slane %v1630, 4
  %v1632 = vmax.f32 %v1630, %v1631
  %v1633 = vrot.slane %v1632, 2
  %v1634 = vmax.f32 %v1632, %v1633
  %v1635 = vrot.slane %v1634, 1
  %v1636 = vmax.f32 %v1634, %v1635
  %v1637 = vsel %vm264, %v204, -inf
  %v1638 = vrot.slane %v1637, 4
  %v1639 = vmax.f32 %v1637, %v1638
  %v1640 = vrot.slane %v1639, 2
  %v1641 = vmax.f32 %v1639, %v1640
  %v1642 = vrot.slane %v1641, 1
  %v1643 = vmax.f32 %v1641, %v1642
  %v1644 = vsel %vm264, %v205, -inf
  %v1645 = vrot.slane %v1644, 4
  %v1646 = vmax.f32 %v1644, %v1645
  %v1647 = vrot.slane %v1646, 2
  %v1648 = vmax.f32 %v1646, %v1647
  %v1649 = vrot.slane %v1648, 1
  %v1650 = vmax.f32 %v1648, %v1649
  %v1651 = vsel %vm264, %v206, -inf
  %v1652 = vrot.slane %v1651, 4
  %v1653 = vmax.f32 %v1651, %v1652
  %v1654 = vrot.slane %v1653, 2
  %v1655 = vmax.f32 %v1653, %v1654
  %v1656 = vrot.slane %v1655, 1
  %v1657 = vmax.f32 %v1655, %v1656
  %v1658 = vsel %vm264, %v207, -inf
  %v1659 = vrot.slane %v1658, 4
  %v1660 = vmax.f32 %v1658, %v1659
  %v1661 = vrot.slane %v1660, 2
  %v1662 = vmax.f32 %v1660, %v1661
  %v1663 = vrot.slane %v1662, 1
  %v1664 = vmax.f32 %v1662, %v1663
  %v1665 = vsel %vm264, %v208, -inf
  %v1666 = vrot.slane %v1665, 4
  %v1667 = vmax.f32 %v1665, %v1666
  %v1668 = vrot.slane %v1667, 2
  %v1669 = vmax.f32 %v1667, %v1668
  %v1670 = vrot.slane %v1669, 1
  %v1671 = vmax.f32 %v1669, %v1670
  %v1672 = vsel %vm264, %v209, -inf
  %v1673 = vrot.slane %v1672, 4
  %v1674 = vmax.f32 %v1672, %v1673
  %v1675 = vrot.slane %v1674, 2
  %v1676 = vmax.f32 %v1674, %v1675
  %v1677 = vrot.slane %v1676, 1
  %v1678 = vmax.f32 %v1676, %v1677
  %v1679 = vsel %vm264, %v210, -inf
  %v1680 = vrot.slane %v1679, 4
  %v1681 = vmax.f32 %v1679, %v1680
  %v1682 = vrot.slane %v1681, 2
  %v1683 = vmax.f32 %v1681, %v1682
  %v1684 = vrot.slane %v1683, 1
  %v1685 = vmax.f32 %v1683, %v1684
  %v1686 = vsel %vm264, %v211, -inf
  %v1687 = vrot.slane %v1686, 4
  %v1688 = vmax.f32 %v1686, %v1687
  %v1689 = vrot.slane %v1688, 2
  %v1690 = vmax.f32 %v1688, %v1689
  %v1691 = vrot.slane %v1690, 1
  %v1692 = vmax.f32 %v1690, %v1691
  %v1693 = vsel %vm264, %v212, -inf
  %v1694 = vrot.slane %v1693, 4
  %v1695 = vmax.f32 %v1693, %v1694
  %v1696 = vrot.slane %v1695, 2
  %v1697 = vmax.f32 %v1695, %v1696
  %v1698 = vrot.slane %v1697, 1
  %v1699 = vmax.f32 %v1697, %v1698
  %v1700 = vsel %vm264, %v213, -inf
  %v1701 = vrot.slane %v1700, 4
  %v1702 = vmax.f32 %v1700, %v1701
  %v1703 = vrot.slane %v1702, 2
  %v1704 = vmax.f32 %v1702, %v1703
  %v1705 = vrot.slane %v1704, 1
  %v1706 = vmax.f32 %v1704, %v1705
  %v1707 = vsel %vm264, %v214, -inf
  %v1708 = vrot.slane %v1707, 4
  %v1709 = vmax.f32 %v1707, %v1708
  %v1710 = vrot.slane %v1709, 2
  %v1711 = vmax.f32 %v1709, %v1710
  %v1712 = vrot.slane %v1711, 1
  %v1713 = vmax.f32 %v1711, %v1712
  %v1714 = vsel %vm264, %v215, -inf
  %v1715 = vrot.slane %v1714, 4
  %v1716 = vmax.f32 %v1714, %v1715
  %v1717 = vrot.slane %v1716, 2
  %v1718 = vmax.f32 %v1716, %v1717
  %v1719 = vrot.slane %v1718, 1
  %v1720 = vmax.f32 %v1718, %v1719
  %v1721 = vsel %vm264, %v216, -inf
  %v1722 = vrot.slane %v1721, 4
  %v1723 = vmax.f32 %v1721, %v1722
  %v1724 = vrot.slane %v1723, 2
  %v1725 = vmax.f32 %v1723, %v1724
  %v1726 = vrot.slane %v1725, 1
  %v1727 = vmax.f32 %v1725, %v1726
  %v1728 = vsel %vm264, %v217, -inf
  %v1729 = vrot.slane %v1728, 4
  %v1730 = vmax.f32 %v1728, %v1729
  %v1731 = vrot.slane %v1730, 2
  %v1732 = vmax.f32 %v1730, %v1731
  %v1733 = vrot.slane %v1732, 1
  %v1734 = vmax.f32 %v1732, %v1733
  %v1735 = vsel %vm264, %v218, -inf
  %v1736 = vrot.slane %v1735, 4
  %v1737 = vmax.f32 %v1735, %v1736
  %v1738 = vrot.slane %v1737, 2
  %v1739 = vmax.f32 %v1737, %v1738
  %v1740 = vrot.slane %v1739, 1
  %v1741 = vmax.f32 %v1739, %v1740
  %v1742 = vsel %vm264, %v219, -inf
  %v1743 = vrot.slane %v1742, 4
  %v1744 = vmax.f32 %v1742, %v1743
  %v1745 = vrot.slane %v1744, 2
  %v1746 = vmax.f32 %v1744, %v1745
  %v1747 = vrot.slane %v1746, 1
  %v1748 = vmax.f32 %v1746, %v1747
  %v1749 = vsel %vm264, %v220, -inf
  %v1750 = vrot.slane %v1749, 4
  %v1751 = vmax.f32 %v1749, %v1750
  %v1752 = vrot.slane %v1751, 2
  %v1753 = vmax.f32 %v1751, %v1752
  %v1754 = vrot.slane %v1753, 1
  %v1755 = vmax.f32 %v1753, %v1754
  %v1756 = vsel %vm264, %v221, -inf
  %v1757 = vrot.slane %v1756, 4
  %v1758 = vmax.f32 %v1756, %v1757
  %v1759 = vrot.slane %v1758, 2
  %v1760 = vmax.f32 %v1758, %v1759
  %v1761 = vrot.slane %v1760, 1
  %v1762 = vmax.f32 %v1760, %v1761
  %v1763 = vsel %vm264, %v222, -inf
  %v1764 = vrot.slane %v1763, 4
  %v1765 = vmax.f32 %v1763, %v1764
  %v1766 = vrot.slane %v1765, 2
  %v1767 = vmax.f32 %v1765, %v1766
  %v1768 = vrot.slane %v1767, 1
  %v1769 = vmax.f32 %v1767, %v1768
  %v1770 = vsel %vm264, %v223, -inf
  %v1771 = vrot.slane %v1770, 4
  %v1772 = vmax.f32 %v1770, %v1771
  %v1773 = vrot.slane %v1772, 2
  %v1774 = vmax.f32 %v1772, %v1773
  %v1775 = vrot.slane %v1774, 1
  %v1776 = vmax.f32 %v1774, %v1775
  %v1777 = vsel %vm264, %v224, -inf
  %v1778 = vrot.slane %v1777, 4
  %v1779 = vmax.f32 %v1777, %v1778
  %v1780 = vrot.slane %v1779, 2
  %v1781 = vmax.f32 %v1779, %v1780
  %v1782 = vrot.slane %v1781, 1
  %v1783 = vmax.f32 %v1781, %v1782
  %v1784 = vsel %vm264, %v225, -inf
  %v1785 = vrot.slane %v1784, 4
  %v1786 = vmax.f32 %v1784, %v1785
  %v1787 = vrot.slane %v1786, 2
  %v1788 = vmax.f32 %v1786, %v1787
  %v1789 = vrot.slane %v1788, 1
  %v1790 = vmax.f32 %v1788, %v1789
  %v1791 = vsel %vm264, %v226, -inf
  %v1792 = vrot.slane %v1791, 4
  %v1793 = vmax.f32 %v1791, %v1792
  %v1794 = vrot.slane %v1793, 2
  %v1795 = vmax.f32 %v1793, %v1794
  %v1796 = vrot.slane %v1795, 1
  %v1797 = vmax.f32 %v1795, %v1796
  %v1798 = vsel %vm264, %v227, -inf
  %v1799 = vrot.slane %v1798, 4
  %v1800 = vmax.f32 %v1798, %v1799
  %v1801 = vrot.slane %v1800, 2
  %v1802 = vmax.f32 %v1800, %v1801
  %v1803 = vrot.slane %v1802, 1
  %v1804 = vmax.f32 %v1802, %v1803
  %v1805 = vsel %vm264, %v228, -inf
  %v1806 = vrot.slane %v1805, 4
  %v1807 = vmax.f32 %v1805, %v1806
  %v1808 = vrot.slane %v1807, 2
  %v1809 = vmax.f32 %v1807, %v1808
  %v1810 = vrot.slane %v1809, 1
  %v1811 = vmax.f32 %v1809, %v1810
  %v1812 = vsel %vm264, %v229, -inf
  %v1813 = vrot.slane %v1812, 4
  %v1814 = vmax.f32 %v1812, %v1813
  %v1815 = vrot.slane %v1814, 2
  %v1816 = vmax.f32 %v1814, %v1815
  %v1817 = vrot.slane %v1816, 1
  %v1818 = vmax.f32 %v1816, %v1817
  %v1819 = vsel %vm264, %v230, -inf
  %v1820 = vrot.slane %v1819, 4
  %v1821 = vmax.f32 %v1819, %v1820
  %v1822 = vrot.slane %v1821, 2
  %v1823 = vmax.f32 %v1821, %v1822
  %v1824 = vrot.slane %v1823, 1
  %v1825 = vmax.f32 %v1823, %v1824
  %v1826 = vsel %vm264, %v231, -inf
  %v1827 = vrot.slane %v1826, 4
  %v1828 = vmax.f32 %v1826, %v1827
  %v1829 = vrot.slane %v1828, 2
  %v1830 = vmax.f32 %v1828, %v1829
  %v1831 = vrot.slane %v1830, 1
  %v1832 = vmax.f32 %v1830, %v1831
  %v1833 = vsel %vm264, %v232, -inf
  %v1834 = vrot.slane %v1833, 4
  %v1835 = vmax.f32 %v1833, %v1834
  %v1836 = vrot.slane %v1835, 2
  %v1837 = vmax.f32 %v1835, %v1836
  %v1838 = vrot.slane %v1837, 1
  %v1839 = vmax.f32 %v1837, %v1838
  %v1840 = vsel %vm264, %v233, -inf
  %v1841 = vrot.slane %v1840, 4
  %v1842 = vmax.f32 %v1840, %v1841
  %v1843 = vrot.slane %v1842, 2
  %v1844 = vmax.f32 %v1842, %v1843
  %v1845 = vrot.slane %v1844, 1
  %v1846 = vmax.f32 %v1844, %v1845
  %v1847 = vsel %vm264, %v234, -inf
  %v1848 = vrot.slane %v1847, 4
  %v1849 = vmax.f32 %v1847, %v1848
  %v1850 = vrot.slane %v1849, 2
  %v1851 = vmax.f32 %v1849, %v1850
  %v1852 = vrot.slane %v1851, 1
  %v1853 = vmax.f32 %v1851, %v1852
  %v1854 = vsel %vm264, %v235, -inf
  %v1855 = vrot.slane %v1854, 4
  %v1856 = vmax.f32 %v1854, %v1855
  %v1857 = vrot.slane %v1856, 2
  %v1858 = vmax.f32 %v1856, %v1857
  %v1859 = vrot.slane %v1858, 1
  %v1860 = vmax.f32 %v1858, %v1859
  %v1861 = vsel %vm264, %v236, -inf
  %v1862 = vrot.slane %v1861, 4
  %v1863 = vmax.f32 %v1861, %v1862
  %v1864 = vrot.slane %v1863, 2
  %v1865 = vmax.f32 %v1863, %v1864
  %v1866 = vrot.slane %v1865, 1
  %v1867 = vmax.f32 %v1865, %v1866
  %v1868 = vsel %vm264, %v237, -inf
  %v1869 = vrot.slane %v1868, 4
  %v1870 = vmax.f32 %v1868, %v1869
  %v1871 = vrot.slane %v1870, 2
  %v1872 = vmax.f32 %v1870, %v1871
  %v1873 = vrot.slane %v1872, 1
  %v1874 = vmax.f32 %v1872, %v1873
  %v1875 = vsel %vm264, %v238, -inf
  %v1876 = vrot.slane %v1875, 4
  %v1877 = vmax.f32 %v1875, %v1876
  %v1878 = vrot.slane %v1877, 2
  %v1879 = vmax.f32 %v1877, %v1878
  %v1880 = vrot.slane %v1879, 1
  %v1881 = vmax.f32 %v1879, %v1880
  %v1882 = vsel %vm264, %v239, -inf
  %v1883 = vrot.slane %v1882, 4
  %v1884 = vmax.f32 %v1882, %v1883
  %v1885 = vrot.slane %v1884, 2
  %v1886 = vmax.f32 %v1884, %v1885
  %v1887 = vrot.slane %v1886, 1
  %v1888 = vmax.f32 %v1886, %v1887
  %v1889 = vsel %vm264, %v240, -inf
  %v1890 = vrot.slane %v1889, 4
  %v1891 = vmax.f32 %v1889, %v1890
  %v1892 = vrot.slane %v1891, 2
  %v1893 = vmax.f32 %v1891, %v1892
  %v1894 = vrot.slane %v1893, 1
  %v1895 = vmax.f32 %v1893, %v1894
  %v1896 = vsel %vm264, %v241, -inf
  %v1897 = vrot.slane %v1896, 4
  %v1898 = vmax.f32 %v1896, %v1897
  %v1899 = vrot.slane %v1898, 2
  %v1900 = vmax.f32 %v1898, %v1899
  %v1901 = vrot.slane %v1900, 1
  %v1902 = vmax.f32 %v1900, %v1901
  %v1903 = vsel %vm264, %v242, -inf
  %v1904 = vrot.slane %v1903, 4
  %v1905 = vmax.f32 %v1903, %v1904
  %v1906 = vrot.slane %v1905, 2
  %v1907 = vmax.f32 %v1905, %v1906
  %v1908 = vrot.slane %v1907, 1
  %v1909 = vmax.f32 %v1907, %v1908
  %v1910 = vsel %vm264, %v243, -inf
  %v1911 = vrot.slane %v1910, 4
  %v1912 = vmax.f32 %v1910, %v1911
  %v1913 = vrot.slane %v1912, 2
  %v1914 = vmax.f32 %v1912, %v1913
  %v1915 = vrot.slane %v1914, 1
  %v1916 = vmax.f32 %v1914, %v1915
  %v1917 = vsel %vm264, %v244, -inf
  %v1918 = vrot.slane %v1917, 4
  %v1919 = vmax.f32 %v1917, %v1918
  %v1920 = vrot.slane %v1919, 2
  %v1921 = vmax.f32 %v1919, %v1920
  %v1922 = vrot.slane %v1921, 1
  %v1923 = vmax.f32 %v1921, %v1922
  %v1924 = vsel %vm264, %v245, -inf
  %v1925 = vrot.slane %v1924, 4
  %v1926 = vmax.f32 %v1924, %v1925
  %v1927 = vrot.slane %v1926, 2
  %v1928 = vmax.f32 %v1926, %v1927
  %v1929 = vrot.slane %v1928, 1
  %v1930 = vmax.f32 %v1928, %v1929
  %v1931 = vsel %vm264, %v246, -inf
  %v1932 = vrot.slane %v1931, 4
  %v1933 = vmax.f32 %v1931, %v1932
  %v1934 = vrot.slane %v1933, 2
  %v1935 = vmax.f32 %v1933, %v1934
  %v1936 = vrot.slane %v1935, 1
  %v1937 = vmax.f32 %v1935, %v1936
  %v1938 = vsel %vm264, %v247, -inf
  %v1939 = vrot.slane %v1938, 4
  %v1940 = vmax.f32 %v1938, %v1939
  %v1941 = vrot.slane %v1940, 2
  %v1942 = vmax.f32 %v1940, %v1941
  %v1943 = vrot.slane %v1942, 1
  %v1944 = vmax.f32 %v1942, %v1943
  %v1945 = vsel %vm264, %v248, -inf
  %v1946 = vrot.slane %v1945, 4
  %v1947 = vmax.f32 %v1945, %v1946
  %v1948 = vrot.slane %v1947, 2
  %v1949 = vmax.f32 %v1947, %v1948
  %v1950 = vrot.slane %v1949, 1
  %v1951 = vmax.f32 %v1949, %v1950
  %v1952 = vsel %vm264, %v249, -inf
  %v1953 = vrot.slane %v1952, 4
  %v1954 = vmax.f32 %v1952, %v1953
  %v1955 = vrot.slane %v1954, 2
  %v1956 = vmax.f32 %v1954, %v1955
  %v1957 = vrot.slane %v1956, 1
  %v1958 = vmax.f32 %v1956, %v1957
  %v1959 = vsel %vm264, %v250, -inf
  %v1960 = vrot.slane %v1959, 4
  %v1961 = vmax.f32 %v1959, %v1960
  %v1962 = vrot.slane %v1961, 2
  %v1963 = vmax.f32 %v1961, %v1962
  %v1964 = vrot.slane %v1963, 1
  %v1965 = vmax.f32 %v1963, %v1964
  %v1966 = vsel %vm264, %v251, -inf
  %v1967 = vrot.slane %v1966, 4
  %v1968 = vmax.f32 %v1966, %v1967
  %v1969 = vrot.slane %v1968, 2
  %v1970 = vmax.f32 %v1968, %v1969
  %v1971 = vrot.slane %v1970, 1
  %v1972 = vmax.f32 %v1970, %v1971
  %v1973 = vsel %vm264, %v252, -inf
  %v1974 = vrot.slane %v1973, 4
  %v1975 = vmax.f32 %v1973, %v1974
  %v1976 = vrot.slane %v1975, 2
  %v1977 = vmax.f32 %v1975, %v1976
  %v1978 = vrot.slane %v1977, 1
  %v1979 = vmax.f32 %v1977, %v1978
  %v1980 = vsel %vm264, %v253, -inf
  %v1981 = vrot.slane %v1980, 4
  %v1982 = vmax.f32 %v1980, %v1981
  %v1983 = vrot.slane %v1982, 2
  %v1984 = vmax.f32 %v1982, %v1983
  %v1985 = vrot.slane %v1984, 1
  %v1986 = vmax.f32 %v1984, %v1985
  %v1987 = vsel %vm264, %v254, -inf
  %v1988 = vrot.slane %v1987, 4
  %v1989 = vmax.f32 %v1987, %v1988
  %v1990 = vrot.slane %v1989, 2
  %v1991 = vmax.f32 %v1989, %v1990
  %v1992 = vrot.slane %v1991, 1
  %v1993 = vmax.f32 %v1991, %v1992
  %v1994 = vsel %vm264, %v255, -inf
  %v1995 = vrot.slane %v1994, 4
  %v1996 = vmax.f32 %v1994, %v1995
  %v1997 = vrot.slane %v1996, 2
  %v1998 = vmax.f32 %v1996, %v1997
  %v1999 = vrot.slane %v1998, 1
  %v2000 = vmax.f32 %v1998, %v1999
  %v2001 = vsel %vm264, %v256, -inf
  %v2002 = vrot.slane %v2001, 4
  %v2003 = vmax.f32 %v2001, %v2002
  %v2004 = vrot.slane %v2003, 2
  %v2005 = vmax.f32 %v2003, %v2004
  %v2006 = vrot.slane %v2005, 1
  %v2007 = vmax.f32 %v2005, %v2006
  %v2008 = vsel %vm264, %v257, -inf
  %v2009 = vrot.slane %v2008, 4
  %v2010 = vmax.f32 %v2008, %v2009
  %v2011 = vrot.slane %v2010, 2
  %v2012 = vmax.f32 %v2010, %v2011
  %v2013 = vrot.slane %v2012, 1
  %v2014 = vmax.f32 %v2012, %v2013
  %v2015 = vsel %vm264, %v258, -inf
  %v2016 = vrot.slane %v2015, 4
  %v2017 = vmax.f32 %v2015, %v2016
  %v2018 = vrot.slane %v2017, 2
  %v2019 = vmax.f32 %v2017, %v2018
  %v2020 = vrot.slane %v2019, 1
  %v2021 = vmax.f32 %v2019, %v2020
  %v2022 = vsel %vm264, %v259, -inf
  %v2023 = vrot.slane %v2022, 4
  %v2024 = vmax.f32 %v2022, %v2023
  %v2025 = vrot.slane %v2024, 2
  %v2026 = vmax.f32 %v2024, %v2025
  %v2027 = vrot.slane %v2026, 1
  %v2028 = vmax.f32 %v2026, %v2027
  %v2029 = vsel %vm264, %v260, -inf
  %v2030 = vrot.slane %v2029, 4
  %v2031 = vmax.f32 %v2029, %v2030
  %v2032 = vrot.slane %v2031, 2
  %v2033 = vmax.f32 %v2031, %v2032
  %v2034 = vrot.slane %v2033, 1
  %v2035 = vmax.f32 %v2033, %v2034
  %v2036 = vsel %vm264, %v261, -inf
  %v2037 = vrot.slane %v2036, 4
  %v2038 = vmax.f32 %v2036, %v2037
  %v2039 = vrot.slane %v2038, 2
  %v2040 = vmax.f32 %v2038, %v2039
  %v2041 = vrot.slane %v2040, 1
  %v2042 = vmax.f32 %v2040, %v2041
  %v2043 = vsel %vm264, %v262, -inf
  %v2044 = vrot.slane %v2043, 4
  %v2045 = vmax.f32 %v2043, %v2044
  %v2046 = vrot.slane %v2045, 2
  %v2047 = vmax.f32 %v2045, %v2046
  %v2048 = vrot.slane %v2047, 1
  %v2049 = vmax.f32 %v2047, %v2048
  %v2050 = vsel %vm264, %v263, -inf
  %v2051 = vrot.slane %v2050, 4
  %v2052 = vmax.f32 %v2050, %v2051
  %v2053 = vrot.slane %v2052, 2
  %v2054 = vmax.f32 %v2052, %v2053
  %v2055 = vrot.slane %v2054, 1
  %v2056 = vmax.f32 %v2054, %v2055
  %vm2057 = vcmask 31744
  %v2058 = vsel %vm2057, %v271, -inf
  %v2059 = vsel %vm2057, %v327, -inf
  %v2060 = vmax.f32 %v2058, %v2059
  %v2061 = vsel %vm2057, %v278, -inf
  %v2062 = vsel %vm2057, %v334, -inf
  %v2063 = vmax.f32 %v2061, %v2062
  %v2064 = vsel %vm2057, %v285, -inf
  %v2065 = vsel %vm2057, %v341, -inf
  %v2066 = vmax.f32 %v2064, %v2065
  %v2067 = vsel %vm2057, %v292, -inf
  %v2068 = vsel %vm2057, %v348, -inf
  %v2069 = vmax.f32 %v2067, %v2068
  %v2070 = vsel %vm2057, %v299, -inf
  %v2071 = vsel %vm2057, %v355, -inf
  %v2072 = vmax.f32 %v2070, %v2071
  %v2073 = vsel %vm2057, %v306, -inf
  %v2074 = vsel %vm2057, %v362, -inf
  %v2075 = vmax.f32 %v2073, %v2074
  %v2076 = vsel %vm2057, %v313, -inf
  %v2077 = vsel %vm2057, %v369, -inf
  %v2078 = vmax.f32 %v2076, %v2077
  %v2079 = vsel %vm2057, %v320, -inf
  %v2080 = vsel %vm2057, %v376, -inf
  %v2081 = vmax.f32 %v2079, %v2080
  %v2082 = vsel %vm2057, %v383, -inf
  %v2083 = vsel %vm2057, %v439, -inf
  %v2084 = vmax.f32 %v2082, %v2083
  %v2085 = vsel %vm2057, %v390, -inf
  %v2086 = vsel %vm2057, %v446, -inf
  %v2087 = vmax.f32 %v2085, %v2086
  %v2088 = vsel %vm2057, %v397, -inf
  %v2089 = vsel %vm2057, %v453, -inf
  %v2090 = vmax.f32 %v2088, %v2089
  %v2091 = vsel %vm2057, %v404, -inf
  %v2092 = vsel %vm2057, %v460, -inf
  %v2093 = vmax.f32 %v2091, %v2092
  %v2094 = vsel %vm2057, %v411, -inf
  %v2095 = vsel %vm2057, %v467, -inf
  %v2096 = vmax.f32 %v2094, %v2095
  %v2097 = vsel %vm2057, %v418, -inf
  %v2098 = vsel %vm2057, %v474, -inf
  %v2099 = vmax.f32 %v2097, %v2098
  %v2100 = vsel %vm2057, %v425, -inf
  %v2101 = vsel %vm2057, %v481, -inf
  %v2102 = vmax.f32 %v2100, %v2101
  %v2103 = vsel %vm2057, %v432, -inf
  %v2104 = vsel %vm2057, %v488, -inf
  %v2105 = vmax.f32 %v2103, %v2104
  %v2106 = vsel %vm2057, %v495, -inf
  %v2107 = vsel %vm2057, %v551, -inf
  %v2108 = vmax.f32 %v2106, %v2107
  %v2109 = vsel %vm2057, %v502, -inf
  %v2110 = vsel %vm2057, %v558, -inf
  %v2111 = vmax.f32 %v2109, %v2110
  %v2112 = vsel %vm2057, %v509, -inf
  %v2113 = vsel %vm2057, %v565, -inf
  %v2114 = vmax.f32 %v2112, %v2113
  %v2115 = vsel %vm2057, %v516, -inf
  %v2116 = vsel %vm2057, %v572, -inf
  %v2117 = vmax.f32 %v2115, %v2116
  %v2118 = vsel %vm2057, %v523, -inf
  %v2119 = vsel %vm2057, %v579, -inf
  %v2120 = vmax.f32 %v2118, %v2119
  %v2121 = vsel %vm2057, %v530, -inf
  %v2122 = vsel %vm2057, %v586, -inf
  %v2123 = vmax.f32 %v2121, %v2122
  %v2124 = vsel %vm2057, %v537, -inf
  %v2125 = vsel %vm2057, %v593, -inf
  %v2126 = vmax.f32 %v2124, %v2125
  %v2127 = vsel %vm2057, %v544, -inf
  %v2128 = vsel %vm2057, %v600, -inf
  %v2129 = vmax.f32 %v2127, %v2128
  %v2130 = vsel %vm2057, %v607, -inf
  %v2131 = vsel %vm2057, %v663, -inf
  %v2132 = vmax.f32 %v2130, %v2131
  %v2133 = vsel %vm2057, %v614, -inf
  %v2134 = vsel %vm2057, %v670, -inf
  %v2135 = vmax.f32 %v2133, %v2134
  %v2136 = vsel %vm2057, %v621, -inf
  %v2137 = vsel %vm2057, %v677, -inf
  %v2138 = vmax.f32 %v2136, %v2137
  %v2139 = vsel %vm2057, %v628, -inf
  %v2140 = vsel %vm2057, %v684, -inf
  %v2141 = vmax.f32 %v2139, %v2140
  %v2142 = vsel %vm2057, %v635, -inf
  %v2143 = vsel %vm2057, %v691, -inf
  %v2144 = vmax.f32 %v2142, %v2143
  %v2145 = vsel %vm2057, %v642, -inf
  %v2146 = vsel %vm2057, %v698, -inf
  %v2147 = vmax.f32 %v2145, %v2146
  %v2148 = vsel %vm2057, %v649, -inf
  %v2149 = vsel %vm2057, %v705, -inf
  %v2150 = vmax.f32 %v2148, %v2149
  %v2151 = vsel %vm2057, %v656, -inf
  %v2152 = vsel %vm2057, %v712, -inf
  %v2153 = vmax.f32 %v2151, %v2152
  %v2154 = vsel %vm2057, %v719, -inf
  %v2155 = vsel %vm2057, %v775, -inf
  %v2156 = vmax.f32 %v2154, %v2155
  %v2157 = vsel %vm2057, %v726, -inf
  %v2158 = vsel %vm2057, %v782, -inf
  %v2159 = vmax.f32 %v2157, %v2158
  %v2160 = vsel %vm2057, %v733, -inf
  %v2161 = vsel %vm2057, %v789, -inf
  %v2162 = vmax.f32 %v2160, %v2161
  %v2163 = vsel %vm2057, %v740, -inf
  %v2164 = vsel %vm2057, %v796, -inf
  %v2165 = vmax.f32 %v2163, %v2164
  %v2166 = vsel %vm2057, %v747, -inf
  %v2167 = vsel %vm2057, %v803, -inf
  %v2168 = vmax.f32 %v2166, %v2167
  %v2169 = vsel %vm2057, %v754, -inf
  %v2170 = vsel %vm2057, %v810, -inf
  %v2171 = vmax.f32 %v2169, %v2170
  %v2172 = vsel %vm2057, %v761, -inf
  %v2173 = vsel %vm2057, %v817, -inf
  %v2174 = vmax.f32 %v2172, %v2173
  %v2175 = vsel %vm2057, %v768, -inf
  %v2176 = vsel %vm2057, %v824, -inf
  %v2177 = vmax.f32 %v2175, %v2176
  %v2178 = vsel %vm2057, %v831, -inf
  %v2179 = vsel %vm2057, %v887, -inf
  %v2180 = vmax.f32 %v2178, %v2179
  %v2181 = vsel %vm2057, %v838, -inf
  %v2182 = vsel %vm2057, %v894, -inf
  %v2183 = vmax.f32 %v2181, %v2182
  %v2184 = vsel %vm2057, %v845, -inf
  %v2185 = vsel %vm2057, %v901, -inf
  %v2186 = vmax.f32 %v2184, %v2185
  %v2187 = vsel %vm2057, %v852, -inf
  %v2188 = vsel %vm2057, %v908, -inf
  %v2189 = vmax.f32 %v2187, %v2188
  %v2190 = vsel %vm2057, %v859, -inf
  %v2191 = vsel %vm2057, %v915, -inf
  %v2192 = vmax.f32 %v2190, %v2191
  %v2193 = vsel %vm2057, %v866, -inf
  %v2194 = vsel %vm2057, %v922, -inf
  %v2195 = vmax.f32 %v2193, %v2194
  %v2196 = vsel %vm2057, %v873, -inf
  %v2197 = vsel %vm2057, %v929, -inf
  %v2198 = vmax.f32 %v2196, %v2197
  %v2199 = vsel %vm2057, %v880, -inf
  %v2200 = vsel %vm2057, %v936, -inf
  %v2201 = vmax.f32 %v2199, %v2200
  %v2202 = vsel %vm2057, %v943, -inf
  %v2203 = vsel %vm2057, %v999, -inf
  %v2204 = vmax.f32 %v2202, %v2203
  %v2205 = vsel %vm2057, %v950, -inf
  %v2206 = vsel %vm2057, %v1006, -inf
  %v2207 = vmax.f32 %v2205, %v2206
  %v2208 = vsel %vm2057, %v957, -inf
  %v2209 = vsel %vm2057, %v1013, -inf
  %v2210 = vmax.f32 %v2208, %v2209
  %v2211 = vsel %vm2057, %v964, -inf
  %v2212 = vsel %vm2057, %v1020, -inf
  %v2213 = vmax.f32 %v2211, %v2212
  %v2214 = vsel %vm2057, %v971, -inf
  %v2215 = vsel %vm2057, %v1027, -inf
  %v2216 = vmax.f32 %v2214, %v2215
  %v2217 = vsel %vm2057, %v978, -inf
  %v2218 = vsel %vm2057, %v1034, -inf
  %v2219 = vmax.f32 %v2217, %v2218
  %v2220 = vsel %vm2057, %v985, -inf
  %v2221 = vsel %vm2057, %v1041, -inf
  %v2222 = vmax.f32 %v2220, %v2221
  %v2223 = vsel %vm2057, %v992, -inf
  %v2224 = vsel %vm2057, %v1048, -inf
  %v2225 = vmax.f32 %v2223, %v2224
  %v2226 = vsel %vm2057, %v1055, -inf
  %v2227 = vsel %vm2057, %v1111, -inf
  %v2228 = vmax.f32 %v2226, %v2227
  %v2229 = vsel %vm2057, %v1062, -inf
  %v2230 = vsel %vm2057, %v1118, -inf
  %v2231 = vmax.f32 %v2229, %v2230
  %v2232 = vsel %vm2057, %v1069, -inf
  %v2233 = vsel %vm2057, %v1125, -inf
  %v2234 = vmax.f32 %v2232, %v2233
  %v2235 = vsel %vm2057, %v1076, -inf
  %v2236 = vsel %vm2057, %v1132, -inf
  %v2237 = vmax.f32 %v2235, %v2236
  %v2238 = vsel %vm2057, %v1083, -inf
  %v2239 = vsel %vm2057, %v1139, -inf
  %v2240 = vmax.f32 %v2238, %v2239
  %v2241 = vsel %vm2057, %v1090, -inf
  %v2242 = vsel %vm2057, %v1146, -inf
  %v2243 = vmax.f32 %v2241, %v2242
  %v2244 = vsel %vm2057, %v1097, -inf
  %v2245 = vsel %vm2057, %v1153, -inf
  %v2246 = vmax.f32 %v2244, %v2245
  %v2247 = vsel %vm2057, %v1104, -inf
  %v2248 = vsel %vm2057, %v1160, -inf
  %v2249 = vmax.f32 %v2247, %v2248
  %v2250 = vsel %vm2057, %v1167, -inf
  %v2251 = vsel %vm2057, %v1223, -inf
  %v2252 = vmax.f32 %v2250, %v2251
  %v2253 = vsel %vm2057, %v1174, -inf
  %v2254 = vsel %vm2057, %v1230, -inf
  %v2255 = vmax.f32 %v2253, %v2254
  %v2256 = vsel %vm2057, %v1181, -inf
  %v2257 = vsel %vm2057, %v1237, -inf
  %v2258 = vmax.f32 %v2256, %v2257
  %v2259 = vsel %vm2057, %v1188, -inf
  %v2260 = vsel %vm2057, %v1244, -inf
  %v2261 = vmax.f32 %v2259, %v2260
  %v2262 = vsel %vm2057, %v1195, -inf
  %v2263 = vsel %vm2057, %v1251, -inf
  %v2264 = vmax.f32 %v2262, %v2263
  %v2265 = vsel %vm2057, %v1202, -inf
  %v2266 = vsel %vm2057, %v1258, -inf
  %v2267 = vmax.f32 %v2265, %v2266
  %v2268 = vsel %vm2057, %v1209, -inf
  %v2269 = vsel %vm2057, %v1265, -inf
  %v2270 = vmax.f32 %v2268, %v2269
  %v2271 = vsel %vm2057, %v1216, -inf
  %v2272 = vsel %vm2057, %v1272, -inf
  %v2273 = vmax.f32 %v2271, %v2272
  %v2274 = vsel %vm2057, %v1279, -inf
  %v2275 = vsel %vm2057, %v1335, -inf
  %v2276 = vmax.f32 %v2274, %v2275
  %v2277 = vsel %vm2057, %v1286, -inf
  %v2278 = vsel %vm2057, %v1342, -inf
  %v2279 = vmax.f32 %v2277, %v2278
  %v2280 = vsel %vm2057, %v1293, -inf
  %v2281 = vsel %vm2057, %v1349, -inf
  %v2282 = vmax.f32 %v2280, %v2281
  %v2283 = vsel %vm2057, %v1300, -inf
  %v2284 = vsel %vm2057, %v1356, -inf
  %v2285 = vmax.f32 %v2283, %v2284
  %v2286 = vsel %vm2057, %v1307, -inf
  %v2287 = vsel %vm2057, %v1363, -inf
  %v2288 = vmax.f32 %v2286, %v2287
  %v2289 = vsel %vm2057, %v1314, -inf
  %v2290 = vsel %vm2057, %v1370, -inf
  %v2291 = vmax.f32 %v2289, %v2290
  %v2292 = vsel %vm2057, %v1321, -inf
  %v2293 = vsel %vm2057, %v1377, -inf
  %v2294 = vmax.f32 %v2292, %v2293
  %v2295 = vsel %vm2057, %v1328, -inf
  %v2296 = vsel %vm2057, %v1384, -inf
  %v2297 = vmax.f32 %v2295, %v2296
  %v2298 = vsel %vm2057, %v1391, -inf
  %v2299 = vsel %vm2057, %v1447, -inf
  %v2300 = vmax.f32 %v2298, %v2299
  %v2301 = vsel %vm2057, %v1398, -inf
  %v2302 = vsel %vm2057, %v1454, -inf
  %v2303 = vmax.f32 %v2301, %v2302
  %v2304 = vsel %vm2057, %v1405, -inf
  %v2305 = vsel %vm2057, %v1461, -inf
  %v2306 = vmax.f32 %v2304, %v2305
  %v2307 = vsel %vm2057, %v1412, -inf
  %v2308 = vsel %vm2057, %v1468, -inf
  %v2309 = vmax.f32 %v2307, %v2308
  %v2310 = vsel %vm2057, %v1419, -inf
  %v2311 = vsel %vm2057, %v1475, -inf
  %v2312 = vmax.f32 %v2310, %v2311
  %v2313 = vsel %vm2057, %v1426, -inf
  %v2314 = vsel %vm2057, %v1482, -inf
  %v2315 = vmax.f32 %v2313, %v2314
  %v2316 = vsel %vm2057, %v1433, -inf
  %v2317 = vsel %vm2057, %v1489, -inf
  %v2318 = vmax.f32 %v2316, %v2317
  %v2319 = vsel %vm2057, %v1440, -inf
  %v2320 = vsel %vm2057, %v1496, -inf
  %v2321 = vmax.f32 %v2319, %v2320
  %v2322 = vsel %vm2057, %v1503, -inf
  %v2323 = vsel %vm2057, %v1559, -inf
  %v2324 = vmax.f32 %v2322, %v2323
  %v2325 = vsel %vm2057, %v1510, -inf
  %v2326 = vsel %vm2057, %v1566, -inf
  %v2327 = vmax.f32 %v2325, %v2326
  %v2328 = vsel %vm2057, %v1517, -inf
  %v2329 = vsel %vm2057, %v1573, -inf
  %v2330 = vmax.f32 %v2328, %v2329
  %v2331 = vsel %vm2057, %v1524, -inf
  %v2332 = vsel %vm2057, %v1580, -inf
  %v2333 = vmax.f32 %v2331, %v2332
  %v2334 = vsel %vm2057, %v1531, -inf
  %v2335 = vsel %vm2057, %v1587, -inf
  %v2336 = vmax.f32 %v2334, %v2335
  %v2337 = vsel %vm2057, %v1538, -inf
  %v2338 = vsel %vm2057, %v1594, -inf
  %v2339 = vmax.f32 %v2337, %v2338
  %v2340 = vsel %vm2057, %v1545, -inf
  %v2341 = vsel %vm2057, %v1601, -inf
  %v2342 = vmax.f32 %v2340, %v2341
  %v2343 = vsel %vm2057, %v1552, -inf
  %v2344 = vsel %vm2057, %v1608, -inf
  %v2345 = vmax.f32 %v2343, %v2344
  %v2346 = vsel %vm2057, %v1615, -inf
  %v2347 = vsel %vm2057, %v1671, -inf
  %v2348 = vmax.f32 %v2346, %v2347
  %v2349 = vsel %vm2057, %v1622, -inf
  %v2350 = vsel %vm2057, %v1678, -inf
  %v2351 = vmax.f32 %v2349, %v2350
  %v2352 = vsel %vm2057, %v1629, -inf
  %v2353 = vsel %vm2057, %v1685, -inf
  %v2354 = vmax.f32 %v2352, %v2353
  %v2355 = vsel %vm2057, %v1636, -inf
  %v2356 = vsel %vm2057, %v1692, -inf
  %v2357 = vmax.f32 %v2355, %v2356
  %v2358 = vsel %vm2057, %v1643, -inf
  %v2359 = vsel %vm2057, %v1699, -inf
  %v2360 = vmax.f32 %v2358, %v2359
  %v2361 = vsel %vm2057, %v1650, -inf
  %v2362 = vsel %vm2057, %v1706, -inf
  %v2363 = vmax.f32 %v2361, %v2362
  %v2364 = vsel %vm2057, %v1657, -inf
  %v2365 = vsel %vm2057, %v1713, -inf
  %v2366 = vmax.f32 %v2364, %v2365
  %v2367 = vsel %vm2057, %v1664, -inf
  %v2368 = vsel %vm2057, %v1720, -inf
  %v2369 = vmax.f32 %v2367, %v2368
  %v2370 = vsel %vm2057, %v1727, -inf
  %v2371 = vsel %vm2057, %v1783, -inf
  %v2372 = vmax.f32 %v2370, %v2371
  %v2373 = vsel %vm2057, %v1734, -inf
  %v2374 = vsel %vm2057, %v1790, -inf
  %v2375 = vmax.f32 %v2373, %v2374
  %v2376 = vsel %vm2057, %v1741, -inf
  %v2377 = vsel %vm2057, %v1797, -inf
  %v2378 = vmax.f32 %v2376, %v2377
  %v2379 = vsel %vm2057, %v1748, -inf
  %v2380 = vsel %vm2057, %v1804, -inf
  %v2381 = vmax.f32 %v2379, %v2380
  %v2382 = vsel %vm2057, %v1755, -inf
  %v2383 = vsel %vm2057, %v1811, -inf
  %v2384 = vmax.f32 %v2382, %v2383
  %v2385 = vsel %vm2057, %v1762, -inf
  %v2386 = vsel %vm2057, %v1818, -inf
  %v2387 = vmax.f32 %v2385, %v2386
  %v2388 = vsel %vm2057, %v1769, -inf
  %v2389 = vsel %vm2057, %v1825, -inf
  %v2390 = vmax.f32 %v2388, %v2389
  %v2391 = vsel %vm2057, %v1776, -inf
  %v2392 = vsel %vm2057, %v1832, -inf
  %v2393 = vmax.f32 %v2391, %v2392
  %v2394 = vsel %vm2057, %v1839, -inf
  %v2395 = vsel %vm2057, %v1895, -inf
  %v2396 = vmax.f32 %v2394, %v2395
  %v2397 = vsel %vm2057, %v1846, -inf
  %v2398 = vsel %vm2057, %v1902, -inf
  %v2399 = vmax.f32 %v2397, %v2398
  %v2400 = vsel %vm2057, %v1853, -inf
  %v2401 = vsel %vm2057, %v1909, -inf
  %v2402 = vmax.f32 %v2400, %v2401
  %v2403 = vsel %vm2057, %v1860, -inf
  %v2404 = vsel %vm2057, %v1916, -inf
  %v2405 = vmax.f32 %v2403, %v2404
  %v2406 = vsel %vm2057, %v1867, -inf
  %v2407 = vsel %vm2057, %v1923, -inf
  %v2408 = vmax.f32 %v2406, %v2407
  %v2409 = vsel %vm2057, %v1874, -inf
  %v2410 = vsel %vm2057, %v1930, -inf
  %v2411 = vmax.f32 %v2409, %v2410
  %v2412 = vsel %vm2057, %v1881, -inf
  %v2413 = vsel %vm2057, %v1937, -inf
  %v2414 = vmax.f32 %v2412, %v2413
  %v2415 = vsel %vm2057, %v1888, -inf
  %v2416 = vsel %vm2057, %v1944, -inf
  %v2417 = vmax.f32 %v2415, %v2416
  %v2418 = vsel %vm2057, %v1951, -inf
  %v2419 = vsel %vm2057, %v2007, -inf
  %v2420 = vmax.f32 %v2418, %v2419
  %v2421 = vsel %vm2057, %v1958, -inf
  %v2422 = vsel %vm2057, %v2014, -inf
  %v2423 = vmax.f32 %v2421, %v2422
  %v2424 = vsel %vm2057, %v1965, -inf
  %v2425 = vsel %vm2057, %v2021, -inf
  %v2426 = vmax.f32 %v2424, %v2425
  %v2427 = vsel %vm2057, %v1972, -inf
  %v2428 = vsel %vm2057, %v2028, -inf
  %v2429 = vmax.f32 %v2427, %v2428
  %v2430 = vsel %vm2057, %v1979, -inf
  %v2431 = vsel %vm2057, %v2035, -inf
  %v2432 = vmax.f32 %v2430, %v2431
  %v2433 = vsel %vm2057, %v1986, -inf
  %v2434 = vsel %vm2057, %v2042, -inf
  %v2435 = vmax.f32 %v2433, %v2434
  %v2436 = vsel %vm2057, %v1993, -inf
  %v2437 = vsel %vm2057, %v2049, -inf
  %v2438 = vmax.f32 %v2436, %v2437
  %v2439 = vsel %vm2057, %v2000, -inf
  %v2440 = vsel %vm2057, %v2056, -inf
  %v2441 = vmax.f32 %v2439, %v2440
  %vm2570 = vcmask 1041409
  %v2571 = vsel %vm2570, %v2063, %v2060
  %vm2572 = vcmask 1042434
  %v2573 = vsel %vm2572, %v2066, %v2571
  %vm2574 = vcmask 1043459
  %v2575 = vsel %vm2574, %v2069, %v2573
  %vm2576 = vcmask 1044484
  %v2577 = vsel %vm2576, %v2072, %v2575
  %vm2578 = vcmask 1045509
  %v2579 = vsel %vm2578, %v2075, %v2577
  %vm2580 = vcmask 1046534
  %v2581 = vsel %vm2580, %v2078, %v2579
  %vm2582 = vcmask 1047559
  %v2583 = vsel %vm2582, %v2081, %v2581
  %v2584 = vsel %vm2570, %v2087, %v2084
  %v2585 = vsel %vm2572, %v2090, %v2584
  %v2586 = vsel %vm2574, %v2093, %v2585
  %v2587 = vsel %vm2576, %v2096, %v2586
  %v2588 = vsel %vm2578, %v2099, %v2587
  %v2589 = vsel %vm2580, %v2102, %v2588
  %v2590 = vsel %vm2582, %v2105, %v2589
  %v2591 = vsel %vm2570, %v2111, %v2108
  %v2592 = vsel %vm2572, %v2114, %v2591
  %v2593 = vsel %vm2574, %v2117, %v2592
  %v2594 = vsel %vm2576, %v2120, %v2593
  %v2595 = vsel %vm2578, %v2123, %v2594
  %v2596 = vsel %vm2580, %v2126, %v2595
  %v2597 = vsel %vm2582, %v2129, %v2596
  %v2598 = vsel %vm2570, %v2135, %v2132
  %v2599 = vsel %vm2572, %v2138, %v2598
  %v2600 = vsel %vm2574, %v2141, %v2599
  %v2601 = vsel %vm2576, %v2144, %v2600
  %v2602 = vsel %vm2578, %v2147, %v2601
  %v2603 = vsel %vm2580, %v2150, %v2602
  %v2604 = vsel %vm2582, %v2153, %v2603
  %v2605 = vsel %vm2570, %v2159, %v2156
  %v2606 = vsel %vm2572, %v2162, %v2605
  %v2607 = vsel %vm2574, %v2165, %v2606
  %v2608 = vsel %vm2576, %v2168, %v2607
  %v2609 = vsel %vm2578, %v2171, %v2608
  %v2610 = vsel %vm2580, %v2174, %v2609
  %v2611 = vsel %vm2582, %v2177, %v2610
  %v2612 = vsel %vm2570, %v2183, %v2180
  %v2613 = vsel %vm2572, %v2186, %v2612
  %v2614 = vsel %vm2574, %v2189, %v2613
  %v2615 = vsel %vm2576, %v2192, %v2614
  %v2616 = vsel %vm2578, %v2195, %v2615
  %v2617 = vsel %vm2580, %v2198, %v2616
  %v2618 = vsel %vm2582, %v2201, %v2617
  %v2619 = vsel %vm2570, %v2207, %v2204
  %v2620 = vsel %vm2572, %v2210, %v2619
  %v2621 = vsel %vm2574, %v2213, %v2620
  %v2622 = vsel %vm2576, %v2216, %v2621
  %v2623 = vsel %vm2578, %v2219, %v2622
  %v2624 = vsel %vm2580, %v2222, %v2623
  %v2625 = vsel %vm2582, %v2225, %v2624
  %v2626 = vsel %vm2570, %v2231, %v2228
  %v2627 = vsel %vm2572, %v2234, %v2626
  %v2628 = vsel %vm2574, %v2237, %v2627
  %v2629 = vsel %vm2576, %v2240, %v2628
  %v2630 = vsel %vm2578, %v2243, %v2629
  %v2631 = vsel %vm2580, %v2246, %v2630
  %v2632 = vsel %vm2582, %v2249, %v2631
  %v2633 = vsel %vm2570, %v2255, %v2252
  %v2634 = vsel %vm2572, %v2258, %v2633
  %v2635 = vsel %vm2574, %v2261, %v2634
  %v2636 = vsel %vm2576, %v2264, %v2635
  %v2637 = vsel %vm2578, %v2267, %v2636
  %v2638 = vsel %vm2580, %v2270, %v2637
  %v2639 = vsel %vm2582, %v2273, %v2638
  %v2640 = vsel %vm2570, %v2279, %v2276
  %v2641 = vsel %vm2572, %v2282, %v2640
  %v2642 = vsel %vm2574, %v2285, %v2641
  %v2643 = vsel %vm2576, %v2288, %v2642
  %v2644 = vsel %vm2578, %v2291, %v2643
  %v2645 = vsel %vm2580, %v2294, %v2644
  %v2646 = vsel %vm2582, %v2297, %v2645
  %v2647 = vsel %vm2570, %v2303, %v2300
  %v2648 = vsel %vm2572, %v2306, %v2647
  %v2649 = vsel %vm2574, %v2309, %v2648
  %v2650 = vsel %vm2576, %v2312, %v2649
  %v2651 = vsel %vm2578, %v2315, %v2650
  %v2652 = vsel %vm2580, %v2318, %v2651
  %v2653 = vsel %vm2582, %v2321, %v2652
  %v2654 = vsel %vm2570, %v2327, %v2324
  %v2655 = vsel %vm2572, %v2330, %v2654
  %v2656 = vsel %vm2574, %v2333, %v2655
  %v2657 = vsel %vm2576, %v2336, %v2656
  %v2658 = vsel %vm2578, %v2339, %v2657
  %v2659 = vsel %vm2580, %v2342, %v2658
  %v2660 = vsel %vm2582, %v2345, %v2659
  %v2661 = vsel %vm2570, %v2351, %v2348
  %v2662 = vsel %vm2572, %v2354, %v2661
  %v2663 = vsel %vm2574, %v2357, %v2662
  %v2664 = vsel %vm2576, %v2360, %v2663
  %v2665 = vsel %vm2578, %v2363, %v2664
  %v2666 = vsel %vm2580, %v2366, %v2665
  %v2667 = vsel %vm2582, %v2369, %v2666
  %v2668 = vsel %vm2570, %v2375, %v2372
  %v2669 = vsel %vm2572, %v2378, %v2668
  %v2670 = vsel %vm2574, %v2381, %v2669
  %v2671 = vsel %vm2576, %v2384, %v2670
  %v2672 = vsel %vm2578, %v2387, %v2671
  %v2673 = vsel %vm2580, %v2390, %v2672
  %v2674 = vsel %vm2582, %v2393, %v2673
  %v2675 = vsel %vm2570, %v2399, %v2396
  %v2676 = vsel %vm2572, %v2402, %v2675
  %v2677 = vsel %vm2574, %v2405, %v2676
  %v2678 = vsel %vm2576, %v2408, %v2677
  %v2679 = vsel %vm2578, %v2411, %v2678
  %v2680 = vsel %vm2580, %v2414, %v2679
  %v2681 = vsel %vm2582, %v2417, %v2680
  %v2682 = vsel %vm2570, %v2423, %v2420
  %v2683 = vsel %vm2572, %v2426, %v2682
  %v2684 = vsel %vm2574, %v2429, %v2683
  %v2685 = vsel %vm2576, %v2432, %v2684
  %v2686 = vsel %vm2578, %v2435, %v2685
  %v2687 = vsel %vm2580, %v2438, %v2686
  %v2688 = vsel %vm2582, %v2441, %v2687
  %2705 = vst.msk [vmem:[%s1] sm:$0xff] %vm2057, %v2583
  %2706 = vst.msk [vmem:[%s1 + $0x8] sm:$0xff] %vm2057, %v2590
  %2707 = vst.msk [vmem:[%s1 + $0x10] sm:$0xff] %vm2057, %v2597
  %2708 = vst.msk [vmem:[%s1 + $0x18] sm:$0xff] %vm2057, %v2604
  %2709 = vst.msk [vmem:[%s1 + $0x20] sm:$0xff] %vm2057, %v2611
  %2710 = vst.msk [vmem:[%s1 + $0x28] sm:$0xff] %vm2057, %v2618
  %2711 = vst.msk [vmem:[%s1 + $0x30] sm:$0xff] %vm2057, %v2625
  %2712 = vst.msk [vmem:[%s1 + $0x38] sm:$0xff] %vm2057, %v2632
  %2713 = vst.msk [vmem:[%s1 + $0x40] sm:$0xff] %vm2057, %v2639
  %2714 = vst.msk [vmem:[%s1 + $0x48] sm:$0xff] %vm2057, %v2646
  %2715 = vst.msk [vmem:[%s1 + $0x50] sm:$0xff] %vm2057, %v2653
  %2716 = vst.msk [vmem:[%s1 + $0x58] sm:$0xff] %vm2057, %v2660
  %2717 = vst.msk [vmem:[%s1 + $0x60] sm:$0xff] %vm2057, %v2667
  %2718 = vst.msk [vmem:[%s1 + $0x68] sm:$0xff] %vm2057, %v2674
  %2719 = vst.msk [vmem:[%s1 + $0x70] sm:$0xff] %vm2057, %v2681
  %2720 = vst.msk [vmem:[%s1 + $0x78] sm:$0xff] %vm2057, %v2688
  // Predicated region
  $region6: #{tpu_custom_call.1} parent=0 // pred_check
    _
  $region7: #{tpu_custom_call.1} parent=0 // pred_check_branch
    %2722 = sbr.rel (0) target = $region9
  $region8: #{tpu_custom_call.1} parent=0 // pred_region
    _
  $region9: #{tpu_custom_call.1} parent=0 // pred_fallthru
    _
  // Predicated region
  $region10: #{tpu_custom_call.1} parent=0 // pred_check
    _
  $region11: #{tpu_custom_call.1} parent=0 // pred_check_branch
    %2724 = sbr.rel (0) target = $region13
  $region12: #{tpu_custom_call.1} parent=0 // pred_region
    _
  $region13: #{tpu_custom_call.1} parent=0 // pred_fallthru
    _

</llo_original>
